<compile_context>
chip_gen: v7x
topology: tpu7x:2x2x1
jax: 0.10.0
libtpu: 0.0.40
codegen_flags: <defaults>
</compile_context>

<pallas_src>
import functools

import jax
import jax.numpy as jnp
from jax.experimental import pallas as pl
from jax.experimental.pallas import tpu as pltpu

NEG_SLOPE = 0.01          # nn.LeakyReLU default
N_LAYER1 = 4
N_LAYER2 = 4
NL = N_LAYER1 + N_LAYER2  # 8 linear layers


def _cdiv(a, b):
    return (a + b - 1) // b


def _leaky_relu(x):
    # max(x, 0.01*x) == LeakyReLU(x): 2 VPU ops (mul + max) vs 3 (cmp + mul + select).
    return jnp.maximum(x, NEG_SLOPE * x)


def _hyperset_kernel(x_ref, pool_ref, w0_ref, wmid_ref, wlast_ref, b_ref,
                     out_ref, *, inv_n):
    tb, npad, d = x_ref.shape
    hid = w0_ref.shape[1]
    out_dim = wlast_ref.shape[1]

    b_all = b_ref[...].astype(jnp.float32)           # (NL, max(hid, out_dim)), tiny

    # Free collapse: N was padded to a multiple of 8 in the wrapper, so collapsing
    # the two leading dims is layout-preserving (no scratch, no masked stores).
    h = x_ref[...].astype(jnp.float32).reshape(tb * npad, d)   # (tb*npad, d) f32

    # ---- phase 1: per-element MLP, layers 0 .. n_layer1-1 ---------------------
    h = jnp.dot(h, w0_ref[...], preferred_element_type=jnp.float32)
    h = _leaky_relu(h + b_all[0:1, :hid])
    for l in range(1, N_LAYER1):
        h0 = h
        h = jnp.dot(h, wmid_ref[l - 1], preferred_element_type=jnp.float32)
        h = _leaky_relu(h + b_all[l:l + 1, :hid]) + h0

    # ---- mean over the set dimension: one MXU matmul ---------------------------
    # pool_ref is (tb, tb*npad) with 1.0 at each batch's real-row positions and
    # 0.0 at pad rows (pad rows are nonzero after layer 0, so zeros here both mask
    # them and perform the per-batch sum); the exact f32 scale by 1/N follows.
    h = jnp.dot(pool_ref[...], h, preferred_element_type=jnp.float32) * inv_n   # (tb, hid)

    # ---- phase 2: set-level MLP, layers n_layer1 .. NL-1 ----------------------
    for l in range(N_LAYER1, NL - 1):
        h0 = h
        h = jnp.dot(h, wmid_ref[l - 1], preferred_element_type=jnp.float32)
        h = _leaky_relu(h + b_all[l:l + 1, :hid]) + h0
    y = jnp.dot(h, wlast_ref[...], preferred_element_type=jnp.float32)
    y = y + b_all[NL - 1:NL, :out_dim]

    out_ref[...] = y.astype(out_ref.dtype)


def _pick_tb(B, npad, target_rows=2048):
    """Single grid step unless the batch is large; then tile B in multiples of 8."""
    if B * npad <= 2 * target_rows:
        return B, 1                                    # one step: tb == B
    tb = max(8, (max(8, target_rows // npad) // 8) * 8)
    return tb, _cdiv(B, tb)


def hyperset_forward(all_emb, packed):
    """all_emb: (B, N, D) f32 or bf16. packed: (W0, W_mid, W_last, b_all)."""
    w0, w_mid, w_last, b_all = packed
    B, N, D = all_emb.shape
    out_dim = w_last.shape[1]

    npad = _cdiv(N, 8) * 8
    tb, nblk = _pick_tb(B, npad)
    b_pad = nblk * tb

    x = all_emb
    if npad != N or b_pad != B:
        x = jnp.pad(x, ((0, b_pad - B), (0, npad - N), (0, 0)))

    # Pooling matrix (tb, tb*npad): 1.0 at real-row positions of each batch in the
    # block, 0.0 at pad rows.  Built once in HBM by XLA; identical for every step.
    row = jnp.arange(tb * npad)
    same_batch = (row // npad)[None, :] == jnp.arange(tb)[:, None]
    in_set = ((row % npad) < N)[None, :]
    pool = jnp.where(same_batch & in_set, jnp.float32(1.0), jnp.float32(0.0))

    kernel = functools.partial(_hyperset_kernel, inv_n=1.0 / N)

    out = pl.pallas_call(
        kernel,
        out_shape=jax.ShapeDtypeStruct((b_pad, out_dim), jnp.float32),
        grid=(nblk,),
        in_specs=[
            pl.BlockSpec((tb, npad, D), lambda i: (i, 0, 0)),   # all_emb block
            pl.BlockSpec(pool.shape, lambda i: (0, 0)),         # (tb, tb*npad)
            pl.BlockSpec(w0.shape, lambda i: (0, 0)),           # (D, H)
            pl.BlockSpec(w_mid.shape, lambda i: (0, 0, 0)),     # (6, H, H)
            pl.BlockSpec(w_last.shape, lambda i: (0, 0)),       # (H, out_dim)
            pl.BlockSpec(b_all.shape, lambda i: (0, 0)),        # (8, max(H, out))
        ],
        out_specs=pl.BlockSpec((tb, out_dim), lambda i: (i, 0)),
        compiler_params=pltpu.CompilerParams(
            dimension_semantics=("parallel",)),
    )(x, pool, w0, w_mid, w_last, b_all)

    return out[:B]


# ----------------------------- parameters ------------------------------------
def init_linear(key, fan_in, fan_out):
    # nn.Linear default init: U(-1/sqrt(fan_in), 1/sqrt(fan_in)); weight stored
    # pre-transposed as (fan_in, fan_out) so the kernel does x @ W + b.
    kw, kb = jax.random.split(key)
    bound = 1.0 / (fan_in ** 0.5)
    w = jax.random.uniform(kw, (fan_in, fan_out), jnp.float32, -bound, bound)
    b = jax.random.uniform(kb, (fan_out,), jnp.float32, -bound, bound)
    return w, b


def make_params(key, inp_dim, hidden_dim, out_dim):
    dims_out = [hidden_dim] * (NL - 1) + [out_dim]
    dims_in = [inp_dim] + dims_out[:-1]
    keys = jax.random.split(key, NL)
    return [init_linear(keys[l], dims_in[l], dims_out[l]) for l in range(NL)]


def pack_params(params):
    """Pack the NL (W, b) pairs into 4 stacked tensors (few pallas inputs)."""
    hid = params[0][0].shape[1]
    out_dim = params[NL - 1][0].shape[1]
    hb = max(hid, out_dim)
    w0 = params[0][0]
    w_mid = jnp.stack([params[l][0] for l in range(1, NL - 1)], axis=0)
    w_last = params[NL - 1][0]
    b_all = jnp.zeros((NL, hb), jnp.float32)
    for l, (_, b) in enumerate(params):
        b_all = b_all.at[l, : b.shape[0]].set(b)
    return w0, w_mid, w_last, b_all


# ----------------------------- reference --------------------------------------
def hyperset_reference(all_emb, params):
    """Pure-JAX mirror of HyperSetEncoder.forward (batch_norm=False, dropout=0)."""
    x = all_emb.astype(jnp.float32)
    for l, (w, b) in enumerate(params):
        x0 = x
        x = jnp.matmul(x, w) + b
        if l < NL - 1:
            x = jnp.where(x >= 0, x, NEG_SLOPE * x)
        if 0 < l < NL - 1:
            x = x + x0
        if l == N_LAYER1 - 1:
            x = jnp.mean(x, axis=1)
    return x


if __name__ == "__main__":
    # Small shapes: batch=8, set size N=9 (2*k+1), inp_dim=32, hidden=32, out_dim=16.
    B, N = 8, 9
    inp_dim, hidden_dim, out_dim = 32, 32, 16

    key = jax.random.PRNGKey(0)
    k_x, k_p = jax.random.split(key)
    all_emb = jax.random.normal(k_x, (B, N, inp_dim), dtype=jnp.float32)
    params = make_params(k_p, inp_dim, hidden_dim, out_dim)
    packed = pack_params(params)

    out = jax.block_until_ready(hyperset_forward(all_emb, packed))
    ref = hyperset_reference(all_emb, params)
    assert out.shape == (B, out_dim), out.shape
    # Both kernel and reference run f32 matmuls at the TPU's default (bf16-pass)
    # MXU precision, hence the ~5e-3 tolerance.
    err = float(jnp.max(jnp.abs(out - ref)))
    assert jnp.allclose(out, ref, atol=5e-3, rtol=5e-3), err

    print("KERNEL_OK")
</pallas_src>

<mosaic_0001>
module attributes {stable_mosaic.version = 11 : i64} {
  func.func @_hyperset_kernel(%arg0: i32, %arg1: memref<8x16x32xf32, #tpu.memory_space<vmem>>, %arg2: memref<8x128xf32, #tpu.memory_space<vmem>>, %arg3: memref<32x32xf32, #tpu.memory_space<vmem>>, %arg4: memref<6x32x32xf32, #tpu.memory_space<vmem>>, %arg5: memref<32x16xf32, #tpu.memory_space<vmem>>, %arg6: memref<8x32xf32, #tpu.memory_space<vmem>>, %arg7: memref<8x16xf32, #tpu.memory_space<vmem>>) attributes {dimension_semantics = [#tpu.dimension_semantics<parallel>], iteration_bounds = array<i64: 1>, scalar_prefetch = 0 : i64, scratch_operands = 0 : i64, tpu.core_type = #tpu.core_type<tc>, window_params = [{transform_indices = @transform_0, window_bounds = array<i64: 8, 16, 32>}, {pipeline_mode = #tpu.pipeline_mode<synchronous>, transform_indices = @transform_1, window_bounds = array<i64: 8, 128>}, {pipeline_mode = #tpu.pipeline_mode<synchronous>, transform_indices = @transform_2, window_bounds = array<i64: 32, 32>}, {pipeline_mode = #tpu.pipeline_mode<synchronous>, transform_indices = @transform_3, window_bounds = array<i64: 6, 32, 32>}, {pipeline_mode = #tpu.pipeline_mode<synchronous>, transform_indices = @transform_4, window_bounds = array<i64: 32, 16>}, {pipeline_mode = #tpu.pipeline_mode<synchronous>, transform_indices = @transform_5, window_bounds = array<i64: 8, 32>}, {transform_indices = @transform_6, window_bounds = array<i64: 8, 16>}]} {
    %c0 = arith.constant 0 : index
    %c0_0 = arith.constant 0 : index
    %0 = vector.load %arg6[%c0, %c0_0] : memref<8x32xf32, #tpu.memory_space<vmem>>, vector<8x32xf32>
    %c0_1 = arith.constant 0 : index
    %c0_2 = arith.constant 0 : index
    %c0_3 = arith.constant 0 : index
    %1 = vector.load %arg1[%c0_1, %c0_2, %c0_3] : memref<8x16x32xf32, #tpu.memory_space<vmem>>, vector<8x16x32xf32>
    %2 = vector.shape_cast %1 : vector<8x16x32xf32> to vector<128x32xf32>
    %c0_4 = arith.constant 0 : index
    %c0_5 = arith.constant 0 : index
    %3 = vector.load %arg3[%c0_4, %c0_5] : memref<32x32xf32, #tpu.memory_space<vmem>>, vector<32x32xf32>
    %cst = arith.constant dense<0.000000e+00> : vector<128x32xf32>
    %4 = tpu.matmul %2, %3, %cst {dimension_numbers = #tpu.dot_dimension_numbers<[1], [0], [0], [1], [0, 0, 1, 1], [], []>} : vector<128x32xf32>, vector<32x32xf32>, vector<128x32xf32> -> vector<128x32xf32>
    %5 = vector.extract_strided_slice %0 {offsets = [0, 0], sizes = [1, 32], strides = [1, 1]} : vector<8x32xf32> to vector<1x32xf32>
    %6 = vector.broadcast %5 : vector<1x32xf32> to vector<128x32xf32>
    %7 = arith.addf %4, %6 : vector<128x32xf32>
    %cst_6 = arith.constant 0.00999999977 : f32
    %8 = vector.broadcast %cst_6 : f32 to vector<128x32xf32>
    %9 = arith.mulf %8, %7 : vector<128x32xf32>
    %10 = arith.maximumf %7, %9 : vector<128x32xf32>
    %c0_7 = arith.constant 0 : index
    %c0_8 = arith.constant 0 : index
    %c0_9 = arith.constant 0 : index
    %11 = vector.load %arg4[%c0_7, %c0_8, %c0_9] : memref<6x32x32xf32, #tpu.memory_space<vmem>>, vector<1x32x32xf32>
    %12 = vector.shape_cast %11 : vector<1x32x32xf32> to vector<32x32xf32>
    %cst_10 = arith.constant dense<0.000000e+00> : vector<128x32xf32>
    %13 = tpu.matmul %10, %12, %cst_10 {dimension_numbers = #tpu.dot_dimension_numbers<[1], [0], [0], [1], [0, 0, 1, 1], [], []>} : vector<128x32xf32>, vector<32x32xf32>, vector<128x32xf32> -> vector<128x32xf32>
    %14 = vector.extract_strided_slice %0 {offsets = [1, 0], sizes = [1, 32], strides = [1, 1]} : vector<8x32xf32> to vector<1x32xf32>
    %15 = vector.broadcast %14 : vector<1x32xf32> to vector<128x32xf32>
    %16 = arith.addf %13, %15 : vector<128x32xf32>
    %cst_11 = arith.constant 0.00999999977 : f32
    %17 = vector.broadcast %cst_11 : f32 to vector<128x32xf32>
    %18 = arith.mulf %17, %16 : vector<128x32xf32>
    %19 = arith.maximumf %16, %18 : vector<128x32xf32>
    %20 = arith.addf %19, %10 : vector<128x32xf32>
    %c1 = arith.constant 1 : index
    %c0_12 = arith.constant 0 : index
    %c0_13 = arith.constant 0 : index
    %21 = vector.load %arg4[%c1, %c0_12, %c0_13] : memref<6x32x32xf32, #tpu.memory_space<vmem>>, vector<1x32x32xf32>
    %22 = vector.shape_cast %21 : vector<1x32x32xf32> to vector<32x32xf32>
    %cst_14 = arith.constant dense<0.000000e+00> : vector<128x32xf32>
    %23 = tpu.matmul %20, %22, %cst_14 {dimension_numbers = #tpu.dot_dimension_numbers<[1], [0], [0], [1], [0, 0, 1, 1], [], []>} : vector<128x32xf32>, vector<32x32xf32>, vector<128x32xf32> -> vector<128x32xf32>
    %24 = vector.extract_strided_slice %0 {offsets = [2, 0], sizes = [1, 32], strides = [1, 1]} : vector<8x32xf32> to vector<1x32xf32>
    %25 = vector.broadcast %24 : vector<1x32xf32> to vector<128x32xf32>
    %26 = arith.addf %23, %25 : vector<128x32xf32>
    %cst_15 = arith.constant 0.00999999977 : f32
    %27 = vector.broadcast %cst_15 : f32 to vector<128x32xf32>
    %28 = arith.mulf %27, %26 : vector<128x32xf32>
    %29 = arith.maximumf %26, %28 : vector<128x32xf32>
    %30 = arith.addf %29, %20 : vector<128x32xf32>
    %c2 = arith.constant 2 : index
    %c0_16 = arith.constant 0 : index
    %c0_17 = arith.constant 0 : index
    %31 = vector.load %arg4[%c2, %c0_16, %c0_17] : memref<6x32x32xf32, #tpu.memory_space<vmem>>, vector<1x32x32xf32>
    %32 = vector.shape_cast %31 : vector<1x32x32xf32> to vector<32x32xf32>
    %cst_18 = arith.constant dense<0.000000e+00> : vector<128x32xf32>
    %33 = tpu.matmul %30, %32, %cst_18 {dimension_numbers = #tpu.dot_dimension_numbers<[1], [0], [0], [1], [0, 0, 1, 1], [], []>} : vector<128x32xf32>, vector<32x32xf32>, vector<128x32xf32> -> vector<128x32xf32>
    %34 = vector.extract_strided_slice %0 {offsets = [3, 0], sizes = [1, 32], strides = [1, 1]} : vector<8x32xf32> to vector<1x32xf32>
    %35 = vector.broadcast %34 : vector<1x32xf32> to vector<128x32xf32>
    %36 = arith.addf %33, %35 : vector<128x32xf32>
    %cst_19 = arith.constant 0.00999999977 : f32
    %37 = vector.broadcast %cst_19 : f32 to vector<128x32xf32>
    %38 = arith.mulf %37, %36 : vector<128x32xf32>
    %39 = arith.maximumf %36, %38 : vector<128x32xf32>
    %40 = arith.addf %39, %30 : vector<128x32xf32>
    %c0_20 = arith.constant 0 : index
    %c0_21 = arith.constant 0 : index
    %41 = vector.load %arg2[%c0_20, %c0_21] : memref<8x128xf32, #tpu.memory_space<vmem>>, vector<8x128xf32>
    %cst_22 = arith.constant dense<0.000000e+00> : vector<8x32xf32>
    %42 = tpu.matmul %41, %40, %cst_22 {dimension_numbers = #tpu.dot_dimension_numbers<[1], [0], [0], [1], [0, 0, 1, 1], [], []>} : vector<8x128xf32>, vector<128x32xf32>, vector<8x32xf32> -> vector<8x32xf32>
    %cst_23 = arith.constant 0.111111112 : f32
    %43 = vector.broadcast %cst_23 : f32 to vector<8x32xf32>
    %44 = arith.mulf %42, %43 : vector<8x32xf32>
    %c3 = arith.constant 3 : index
    %c0_24 = arith.constant 0 : index
    %c0_25 = arith.constant 0 : index
    %45 = vector.load %arg4[%c3, %c0_24, %c0_25] : memref<6x32x32xf32, #tpu.memory_space<vmem>>, vector<1x32x32xf32>
    %46 = vector.shape_cast %45 : vector<1x32x32xf32> to vector<32x32xf32>
    %cst_26 = arith.constant dense<0.000000e+00> : vector<8x32xf32>
    %47 = tpu.matmul %44, %46, %cst_26 {dimension_numbers = #tpu.dot_dimension_numbers<[1], [0], [0], [1], [0, 0, 1, 1], [], []>} : vector<8x32xf32>, vector<32x32xf32>, vector<8x32xf32> -> vector<8x32xf32>
    %48 = vector.extract_strided_slice %0 {offsets = [4, 0], sizes = [1, 32], strides = [1, 1]} : vector<8x32xf32> to vector<1x32xf32>
    %49 = vector.broadcast %48 : vector<1x32xf32> to vector<8x32xf32>
    %50 = arith.addf %47, %49 : vector<8x32xf32>
    %cst_27 = arith.constant 0.00999999977 : f32
    %51 = vector.broadcast %cst_27 : f32 to vector<8x32xf32>
    %52 = arith.mulf %51, %50 : vector<8x32xf32>
    %53 = arith.maximumf %50, %52 : vector<8x32xf32>
    %54 = arith.addf %53, %44 : vector<8x32xf32>
    %c4 = arith.constant 4 : index
    %c0_28 = arith.constant 0 : index
    %c0_29 = arith.constant 0 : index
    %55 = vector.load %arg4[%c4, %c0_28, %c0_29] : memref<6x32x32xf32, #tpu.memory_space<vmem>>, vector<1x32x32xf32>
    %56 = vector.shape_cast %55 : vector<1x32x32xf32> to vector<32x32xf32>
    %cst_30 = arith.constant dense<0.000000e+00> : vector<8x32xf32>
    %57 = tpu.matmul %54, %56, %cst_30 {dimension_numbers = #tpu.dot_dimension_numbers<[1], [0], [0], [1], [0, 0, 1, 1], [], []>} : vector<8x32xf32>, vector<32x32xf32>, vector<8x32xf32> -> vector<8x32xf32>
    %58 = vector.extract_strided_slice %0 {offsets = [5, 0], sizes = [1, 32], strides = [1, 1]} : vector<8x32xf32> to vector<1x32xf32>
    %59 = vector.broadcast %58 : vector<1x32xf32> to vector<8x32xf32>
    %60 = arith.addf %57, %59 : vector<8x32xf32>
    %cst_31 = arith.constant 0.00999999977 : f32
    %61 = vector.broadcast %cst_31 : f32 to vector<8x32xf32>
    %62 = arith.mulf %61, %60 : vector<8x32xf32>
    %63 = arith.maximumf %60, %62 : vector<8x32xf32>
    %64 = arith.addf %63, %54 : vector<8x32xf32>
    %c5 = arith.constant 5 : index
    %c0_32 = arith.constant 0 : index
    %c0_33 = arith.constant 0 : index
    %65 = vector.load %arg4[%c5, %c0_32, %c0_33] : memref<6x32x32xf32, #tpu.memory_space<vmem>>, vector<1x32x32xf32>
    %66 = vector.shape_cast %65 : vector<1x32x32xf32> to vector<32x32xf32>
    %cst_34 = arith.constant dense<0.000000e+00> : vector<8x32xf32>
    %67 = tpu.matmul %64, %66, %cst_34 {dimension_numbers = #tpu.dot_dimension_numbers<[1], [0], [0], [1], [0, 0, 1, 1], [], []>} : vector<8x32xf32>, vector<32x32xf32>, vector<8x32xf32> -> vector<8x32xf32>
    %68 = vector.extract_strided_slice %0 {offsets = [6, 0], sizes = [1, 32], strides = [1, 1]} : vector<8x32xf32> to vector<1x32xf32>
    %69 = vector.broadcast %68 : vector<1x32xf32> to vector<8x32xf32>
    %70 = arith.addf %67, %69 : vector<8x32xf32>
    %cst_35 = arith.constant 0.00999999977 : f32
    %71 = vector.broadcast %cst_35 : f32 to vector<8x32xf32>
    %72 = arith.mulf %71, %70 : vector<8x32xf32>
    %73 = arith.maximumf %70, %72 : vector<8x32xf32>
    %74 = arith.addf %73, %64 : vector<8x32xf32>
    %c0_36 = arith.constant 0 : index
    %c0_37 = arith.constant 0 : index
    %75 = vector.load %arg5[%c0_36, %c0_37] : memref<32x16xf32, #tpu.memory_space<vmem>>, vector<32x16xf32>
    %cst_38 = arith.constant dense<0.000000e+00> : vector<8x16xf32>
    %76 = tpu.matmul %74, %75, %cst_38 {dimension_numbers = #tpu.dot_dimension_numbers<[1], [0], [0], [1], [0, 0, 1, 1], [], []>} : vector<8x32xf32>, vector<32x16xf32>, vector<8x16xf32> -> vector<8x16xf32>
    %77 = vector.extract_strided_slice %0 {offsets = [7, 0], sizes = [1, 16], strides = [1, 1]} : vector<8x32xf32> to vector<1x16xf32>
    %78 = vector.broadcast %77 : vector<1x16xf32> to vector<8x16xf32>
    %79 = arith.addf %76, %78 : vector<8x16xf32>
    %c0_39 = arith.constant 0 : index
    %c0_40 = arith.constant 0 : index
    %80 = vector.load %arg7[%c0_39, %c0_40] : memref<8x16xf32, #tpu.memory_space<vmem>>, vector<8x16xf32>
    tpu.vector_store %arg7[%c0_39, %c0_40], %79 {strides = array<i32>} : memref<8x16xf32, #tpu.memory_space<vmem>>, vector<8x16xf32>,
    return
  }
  func.func @transform_0(%arg0: i32) -> (i32, i32, i32) {
    %c0_i32 = arith.constant 0 : i32
    %c0_i32_0 = arith.constant 0 : i32
    %c0_i32_1 = arith.constant 0 : i32
    return %arg0, %c0_i32, %c0_i32_0 : i32, i32, i32
  }
  func.func @transform_1(%arg0: i32) -> (i32, i32) {
    %c0_i32 = arith.constant 0 : i32
    %c0_i32_0 = arith.constant 0 : i32
    %c0_i32_1 = arith.constant 0 : i32
    return %c0_i32, %c0_i32_0 : i32, i32
  }
  func.func @transform_2(%arg0: i32) -> (i32, i32) {
    %c0_i32 = arith.constant 0 : i32
    %c0_i32_0 = arith.constant 0 : i32
    %c0_i32_1 = arith.constant 0 : i32
    return %c0_i32, %c0_i32_0 : i32, i32
  }
  func.func @transform_3(%arg0: i32) -> (i32, i32, i32) {
    %c0_i32 = arith.constant 0 : i32
    %c0_i32_0 = arith.constant 0 : i32
    %c0_i32_1 = arith.constant 0 : i32
    %c0_i32_2 = arith.constant 0 : i32
    return %c0_i32, %c0_i32_0, %c0_i32_1 : i32, i32, i32
  }
  func.func @transform_4(%arg0: i32) -> (i32, i32) {
    %c0_i32 = arith.constant 0 : i32
    %c0_i32_0 = arith.constant 0 : i32
    %c0_i32_1 = arith.constant 0 : i32
    return %c0_i32, %c0_i32_0 : i32, i32
  }
  func.func @transform_5(%arg0: i32) -> (i32, i32) {
    %c0_i32 = arith.constant 0 : i32
    %c0_i32_0 = arith.constant 0 : i32
    %c0_i32_1 = arith.constant 0 : i32
    return %c0_i32, %c0_i32_0 : i32, i32
  }
  func.func @transform_6(%arg0: i32) -> (i32, i32) {
    %c0_i32 = arith.constant 0 : i32
    %c0_i32_0 = arith.constant 0 : i32
    return %arg0, %c0_i32 : i32, i32
  }
}

</mosaic_0001>

<llo_original>
// kernel: tpu_custom_call.1
$region0: #{tpu_custom_call.1}
  #allocation0 [shape = 'u32[]', space=smem, size = 0x4, offset = 0x4, fixed_abs, tag = 'smem constant byte address 0x4 - core index']
  #allocation1 [shape = 'u32[144,128]{1,0:T(1,128)}', space=vmem, size = 0x12000, scoped, tag = 'internal scratch']
  %s0 = inlined_call_operand.hbm [shape: f32[8,16,32], index: 0, kind: input, shape index: {}]
  %s1 = inlined_call_operand.vmem [shape: f32[8,128], index: 1, kind: input, shape index: {}]
  %s2 = inlined_call_operand.vmem [shape: f32[32,32], index: 2, kind: input, shape index: {}]
  %s3 = inlined_call_operand.hbm [shape: f32[6,32,32], index: 3, kind: input, shape index: {}]
  %s4 = inlined_call_operand.vmem [shape: f32[32,16], index: 4, kind: input, shape index: {}]
  %s5 = inlined_call_operand.vmem [shape: f32[8,32], index: 5, kind: input, shape index: {}]
  %s6 = inlined_call_operand.hbm [shape: f32[8,16], index: 6, kind: output, shape index: {}]
  %s7 = sld [smem:[#allocation0]]
  $region42: #{tpu_custom_call.1} parent=0
    _
  %s9 = ssub.s32 1, %s7
  %s10 = scalar_select 0, %s9, %s7
  $region1: #{tpu_custom_call.1} parent=0
    #allocation2 [shape = 'u8[65536]{0}', space=vmem, size = 0x10000, scoped, tag = 'input window, operand 0, single buffered']
    #allocation3 [shape = 's32[1]{0}', space=sflag, size = 0x4, scoped, tag = 'scoped memory for tpu_custom_call.1']
    #allocation4 [shape = 's32[1]{0}', space=sflag, size = 0x4, scoped, tag = 'scoped memory for tpu_custom_call.1']
    #allocation5 [shape = 'u8[98304]{0}', space=vmem, size = 0x18000, scoped, tag = 'input window, operand 3, single buffered']
    #allocation6 [shape = 's32[1]{0}', space=sflag, size = 0x4, scoped, tag = 'scoped memory for tpu_custom_call.1']
    #allocation7 [shape = 'u8[4096]{0}', space=vmem, size = 0x1000, scoped, tag = 'output window, operand 0, single buffered']
    %11 = vsyncpa [#allocation3], 0
    %12 = vsyncpa [#allocation6], 0
    %13 = vsyncpa [#allocation4], 0
    // Predicated region
    $region2: #{tpu_custom_call.1} parent=1 // pred_check
      _
    $region3: #{tpu_custom_call.1} parent=1 // pred_check_branch
      %15 = sbr.rel (0) target = $region5
    $region4: #{tpu_custom_call.1} parent=1 // pred_region
      %s17 = ssub.s32 2048, 2048
      %18 = vsyncadd [#allocation3], %s17
      %s19 = sshll.u32 [#allocation2], 4
      %s20 = int_to_ptr.vmem [resolvable:$true] %s19
      %25 = dma.hbm_to_vmem [thread:$0]  %s0, 2048, %s20, [#allocation3], 128, 128, 8
    $region5: #{tpu_custom_call.1} parent=1 // pred_fallthru
      _
    // Predicated region
    $region6: #{tpu_custom_call.1} parent=1 // pred_check
      _
    $region7: #{tpu_custom_call.1} parent=1 // pred_check_branch
      %27 = sbr.rel (0) target = $region9
    $region8: #{tpu_custom_call.1} parent=1 // pred_region
      _
    $region9: #{tpu_custom_call.1} parent=1 // pred_fallthru
      _
    // Predicated region
    $region10: #{tpu_custom_call.1} parent=1 // pred_check
      _
    $region11: #{tpu_custom_call.1} parent=1 // pred_check_branch
      %29 = sbr.rel (0) target = $region13
    $region12: #{tpu_custom_call.1} parent=1 // pred_region
      _
    $region13: #{tpu_custom_call.1} parent=1 // pred_fallthru
      _
    // Predicated region
    $region14: #{tpu_custom_call.1} parent=1 // pred_check
      _
    $region15: #{tpu_custom_call.1} parent=1 // pred_check_branch
      %31 = sbr.rel (0) target = $region17
    $region16: #{tpu_custom_call.1} parent=1 // pred_region
      %s33 = ssub.s32 3072, 3072
      %34 = vsyncadd [#allocation6], %s33
      %s35 = sshll.u32 [#allocation5], 4
      %s36 = int_to_ptr.vmem [resolvable:$true] %s35
      %41 = dma.hbm_to_vmem [thread:$0]  %s3, 3072, %s36, [#allocation6], 128, 128, 8
    $region17: #{tpu_custom_call.1} parent=1 // pred_fallthru
      _
    // Predicated region
    $region18: #{tpu_custom_call.1} parent=1 // pred_check
      _
    $region19: #{tpu_custom_call.1} parent=1 // pred_check_branch
      %43 = sbr.rel (0) target = $region21
    $region20: #{tpu_custom_call.1} parent=1 // pred_region
      _
    $region21: #{tpu_custom_call.1} parent=1 // pred_fallthru
      _
    // Predicated region
    $region22: #{tpu_custom_call.1} parent=1 // pred_check
      _
    $region23: #{tpu_custom_call.1} parent=1 // pred_check_branch
      %45 = sbr.rel (0) target = $region25
    $region24: #{tpu_custom_call.1} parent=1 // pred_region
      _
    $region25: #{tpu_custom_call.1} parent=1 // pred_fallthru
      _
    // Predicated region
    $region26: #{tpu_custom_call.1} parent=1 // pred_check
      _
    $region27: #{tpu_custom_call.1} parent=1 // pred_check_branch
      %47 = sbr.rel (0) target = $region29
    $region28: #{tpu_custom_call.1} parent=1 // pred_region
      %48 = dma.done [#allocation3], 2048
    $region29: #{tpu_custom_call.1} parent=1 // pred_fallthru
      _
    // Predicated region
    $region30: #{tpu_custom_call.1} parent=1 // pred_check
      _
    $region31: #{tpu_custom_call.1} parent=1 // pred_check_branch
      %50 = sbr.rel (0) target = $region33
    $region32: #{tpu_custom_call.1} parent=1 // pred_region
      %51 = dma.done [#allocation6], 3072
    $region33: #{tpu_custom_call.1} parent=1 // pred_fallthru
      _
    %v52 = vld [vmem:[%s5] sm:$0xff]
    %v53 = vld [vmem:[#allocation2] sm:$0xff]
    %v54 = vld [vmem:[#allocation2 + $0x8] sm:$0xff]
    %v55 = vld [vmem:[#allocation2 + $0x10] sm:$0xff]
    %v56 = vld [vmem:[#allocation2 + $0x18] sm:$0xff]
    %v57 = vld [vmem:[#allocation2 + $0x20] sm:$0xff]
    %v58 = vld [vmem:[#allocation2 + $0x28] sm:$0xff]
    %v59 = vld [vmem:[#allocation2 + $0x30] sm:$0xff]
    %v60 = vld [vmem:[#allocation2 + $0x38] sm:$0xff]
    %v61 = vld [vmem:[#allocation2 + $0x40] sm:$0xff]
    %v62 = vld [vmem:[#allocation2 + $0x48] sm:$0xff]
    %v63 = vld [vmem:[#allocation2 + $0x50] sm:$0xff]
    %v64 = vld [vmem:[#allocation2 + $0x58] sm:$0xff]
    %v65 = vld [vmem:[#allocation2 + $0x60] sm:$0xff]
    %v66 = vld [vmem:[#allocation2 + $0x68] sm:$0xff]
    %v67 = vld [vmem:[#allocation2 + $0x70] sm:$0xff]
    %v68 = vld [vmem:[#allocation2 + $0x78] sm:$0xff]
    %v69 = vld [vmem:[%s2] sm:$0xff]
    %v70 = vld [vmem:[%s2 + $0x8] sm:$0xff]
    %v71 = vld [vmem:[%s2 + $0x10] sm:$0xff]
    %v72 = vld [vmem:[%s2 + $0x18] sm:$0xff]
    %v73 = vlaneseq
    %v74 = vshrl.u32 %v73, 7
    %v75 = vsub.s32 0, %v74
    %v76 = vrot.slane %v52, %v75
    %vm77 = vcmask 261120
    %v79 = vsel %vm77, %v53, 0
    %v82 = vsel %vm77, %v54, 0
    %v85 = vsel %vm77, %v55, 0
    %v88 = vsel %vm77, %v56, 0
    %v91 = vsel %vm77, %v57, 0
    %v94 = vsel %vm77, %v58, 0
    %v97 = vsel %vm77, %v59, 0
    %v100 = vsel %vm77, %v60, 0
    %v103 = vsel %vm77, %v61, 0
    %v106 = vsel %vm77, %v62, 0
    %v109 = vsel %vm77, %v63, 0
    %v112 = vsel %vm77, %v64, 0
    %v115 = vsel %vm77, %v65, 0
    %v118 = vsel %vm77, %v66, 0
    %v121 = vsel %vm77, %v67, 0
    %v124 = vsel %vm77, %v68, 0
    %126 = vmatprep.subr.mxu0 0.0
    %127 = vmatpush1.msra.mxu0 %v69
    %128 = vmatprep.subr.mxu0 0.0
    %129 = vmatpush1.msra.mxu0 %v70
    %130 = vmatprep.subr.mxu0 0.0
    %131 = vmatpush1.msra.mxu0 %v71
    %132 = vmatprep.subr.mxu0 0.0
    %133 = vmatpush1.msra.mxu0 %v72
    %134 = vmatprep.subr.mxu0 0.0
    %135 = vmatpush1.msra.mxu0 0.0
    %136 = vmatprep.subr.mxu0 0.0
    %137 = vmatpush1.msra.mxu0 0.0
    %138 = vmatprep.subr.mxu0 0.0
    %139 = vmatpush1.msra.mxu0 0.0
    %140 = vmatprep.subr.mxu0 0.0
    %141 = vmatpush1.msra.mxu0 0.0
    %142 = vmatprep.subr.mxu0 0.0
    %143 = vmatpush1.msra.mxu0 0.0
    %144 = vmatprep.subr.mxu0 0.0
    %145 = vmatpush1.msra.mxu0 0.0
    %146 = vmatprep.subr.mxu0 0.0
    %147 = vmatpush1.msra.mxu0 0.0
    %148 = vmatprep.subr.mxu0 0.0
    %149 = vmatpush1.msra.mxu0 0.0
    %150 = vmatprep.subr.mxu0 0.0
    %151 = vmatpush1.msra.mxu0 0.0
    %152 = vmatprep.subr.mxu0 0.0
    %153 = vmatpush1.msra.mxu0 0.0
    %154 = vmatprep.subr.mxu0 0.0
    %155 = vmatpush1.msra.mxu0 0.0
    %156 = vmatprep.subr.mxu0 0.0
    %157 = vmatpush1.msra.mxu0 0.0
    %158 = vmatprep.subr.mxu0 0.0
    %159 = vmatpush1.msra.mxu0 0.0
    %160 = vmatprep.subr.mxu0 0.0
    %161 = vmatpush1.msra.mxu0 0.0
    %162 = vmatprep.subr.mxu0 0.0
    %163 = vmatpush1.msra.mxu0 0.0
    %164 = vmatprep.subr.mxu0 0.0
    %165 = vmatpush1.msra.mxu0 0.0
    %166 = vmatprep.subr.mxu0 0.0
    %167 = vmatpush1.msra.mxu0 0.0
    %168 = vmatprep.subr.mxu0 0.0
    %169 = vmatpush1.msra.mxu0 0.0
    %170 = vmatprep.subr.mxu0 0.0
    %171 = vmatpush1.msra.mxu0 0.0
    %172 = vmatprep.subr.mxu0 0.0
    %173 = vmatpush1.msra.mxu0 0.0
    %174 = vmatprep.subr.mxu0 0.0
    %175 = vmatpush1.msra.mxu0 0.0
    %176 = vmatprep.subr.mxu0 0.0
    %177 = vmatpush1.msra.mxu0 0.0
    %178 = vmatprep.subr.mxu0 0.0
    %179 = vmatpush1.msra.mxu0 0.0
    %180 = vmatprep.subr.mxu0 0.0
    %181 = vmatpush1.msra.mxu0 0.0
    %182 = vmatprep.subr.mxu0 0.0
    %183 = vmatpush1.msra.mxu0 0.0
    %184 = vmatprep.subr.mxu0 0.0
    %185 = vmatpush1.msra.mxu0 0.0
    %186 = vmatprep.subr.mxu0 0.0
    %187 = vmatpush1.msra.mxu0 0.0
    %188 = vmatprep.subr.mxu0 0.0
    %189 = vmatpush1.msra.mxu0 0.0
    %190 = vmatprep.mubr.f32.mxu0 0.0
    %191 = vmatmul.mubr.f32.gmra.mrb[0].mxu0 %v79
    %v192 = vpop.f32.mrb[0].mxu0
    %v193 = vadd.f32 %v76, %v192
    %v194 = vpop.f32.mrb[0].mxu0
    %195 = vmatprep.mubr.f32.mxu0 0.0
    %196 = vmatmul.mubr.f32.gmra.mrb[0].mxu0 %v82
    %v197 = vpop.f32.mrb[0].mxu0
    %v198 = vadd.f32 %v76, %v197
    %v199 = vpop.f32.mrb[0].mxu0
    %200 = vmatprep.mubr.f32.mxu0 0.0
    %201 = vmatmul.mubr.f32.gmra.mrb[0].mxu0 %v85
    %v202 = vpop.f32.mrb[0].mxu0
    %v203 = vadd.f32 %v76, %v202
    %v204 = vpop.f32.mrb[0].mxu0
    %205 = vmatprep.mubr.f32.mxu0 0.0
    %206 = vmatmul.mubr.f32.gmra.mrb[0].mxu0 %v88
    %v207 = vpop.f32.mrb[0].mxu0
    %v208 = vadd.f32 %v76, %v207
    %v209 = vpop.f32.mrb[0].mxu0
    %210 = vmatprep.mubr.f32.mxu0 0.0
    %211 = vmatmul.mubr.f32.gmra.mrb[0].mxu0 %v91
    %v212 = vpop.f32.mrb[0].mxu0
    %v213 = vadd.f32 %v76, %v212
    %v214 = vpop.f32.mrb[0].mxu0
    %215 = vmatprep.mubr.f32.mxu0 0.0
    %216 = vmatmul.mubr.f32.gmra.mrb[0].mxu0 %v94
    %v217 = vpop.f32.mrb[0].mxu0
    %v218 = vadd.f32 %v76, %v217
    %v219 = vpop.f32.mrb[0].mxu0
    %220 = vmatprep.mubr.f32.mxu0 0.0
    %221 = vmatmul.mubr.f32.gmra.mrb[0].mxu0 %v97
    %v222 = vpop.f32.mrb[0].mxu0
    %v223 = vadd.f32 %v76, %v222
    %v224 = vpop.f32.mrb[0].mxu0
    %225 = vmatprep.mubr.f32.mxu0 0.0
    %226 = vmatmul.mubr.f32.gmra.mrb[0].mxu0 %v100
    %v227 = vpop.f32.mrb[0].mxu0
    %v228 = vadd.f32 %v76, %v227
    %v229 = vpop.f32.mrb[0].mxu0
    %230 = vmatprep.mubr.f32.mxu0 0.0
    %231 = vmatmul.mubr.f32.gmra.mrb[0].mxu0 %v103
    %v232 = vpop.f32.mrb[0].mxu0
    %v233 = vadd.f32 %v76, %v232
    %v234 = vpop.f32.mrb[0].mxu0
    %235 = vmatprep.mubr.f32.mxu0 0.0
    %236 = vmatmul.mubr.f32.gmra.mrb[0].mxu0 %v106
    %v237 = vpop.f32.mrb[0].mxu0
    %v238 = vadd.f32 %v76, %v237
    %v239 = vpop.f32.mrb[0].mxu0
    %240 = vmatprep.mubr.f32.mxu0 0.0
    %241 = vmatmul.mubr.f32.gmra.mrb[0].mxu0 %v109
    %v242 = vpop.f32.mrb[0].mxu0
    %v243 = vadd.f32 %v76, %v242
    %v244 = vpop.f32.mrb[0].mxu0
    %245 = vmatprep.mubr.f32.mxu0 0.0
    %246 = vmatmul.mubr.f32.gmra.mrb[0].mxu0 %v112
    %v247 = vpop.f32.mrb[0].mxu0
    %v248 = vadd.f32 %v76, %v247
    %v249 = vpop.f32.mrb[0].mxu0
    %250 = vmatprep.mubr.f32.mxu0 0.0
    %251 = vmatmul.mubr.f32.gmra.mrb[0].mxu0 %v115
    %v252 = vpop.f32.mrb[0].mxu0
    %v253 = vadd.f32 %v76, %v252
    %v254 = vpop.f32.mrb[0].mxu0
    %255 = vmatprep.mubr.f32.mxu0 0.0
    %256 = vmatmul.mubr.f32.gmra.mrb[0].mxu0 %v118
    %v257 = vpop.f32.mrb[0].mxu0
    %v258 = vadd.f32 %v76, %v257
    %v259 = vpop.f32.mrb[0].mxu0
    %260 = vmatprep.mubr.f32.mxu0 0.0
    %261 = vmatmul.mubr.f32.gmra.mrb[0].mxu0 %v121
    %v262 = vpop.f32.mrb[0].mxu0
    %v263 = vadd.f32 %v76, %v262
    %v264 = vpop.f32.mrb[0].mxu0
    %265 = vmatprep.mubr.f32.mxu0 0.0
    %266 = vmatmul.mubr.f32.gmra.mrb[0].mxu0 %v124
    %v267 = vpop.f32.mrb[0].mxu0
    %v268 = vadd.f32 %v76, %v267
    %v269 = vpop.f32.mrb[0].mxu0
    %270 = vdwg.mxu0
    %v271 = vmul.f32 %v193, 0.01
    %v272 = vmul.f32 %v198, 0.01
    %v273 = vmul.f32 %v203, 0.01
    %v274 = vmul.f32 %v208, 0.01
    %v275 = vmul.f32 %v213, 0.01
    %v276 = vmul.f32 %v218, 0.01
    %v277 = vmul.f32 %v223, 0.01
    %v278 = vmul.f32 %v228, 0.01
    %v279 = vmul.f32 %v233, 0.01
    %v280 = vmul.f32 %v238, 0.01
    %v281 = vmul.f32 %v243, 0.01
    %v282 = vmul.f32 %v248, 0.01
    %v283 = vmul.f32 %v253, 0.01
    %v284 = vmul.f32 %v258, 0.01
    %v285 = vmul.f32 %v263, 0.01
    %v286 = vmul.f32 %v268, 0.01
    %v287 = vmax.f32 %v193, %v271
    %v288 = vmax.f32 %v198, %v272
    %v289 = vmax.f32 %v203, %v273
    %v290 = vmax.f32 %v208, %v274
    %v291 = vmax.f32 %v213, %v275
    %v292 = vmax.f32 %v218, %v276
    %v293 = vmax.f32 %v223, %v277
    %v294 = vmax.f32 %v228, %v278
    %v295 = vmax.f32 %v233, %v279
    %v296 = vmax.f32 %v238, %v280
    %v297 = vmax.f32 %v243, %v281
    %v298 = vmax.f32 %v248, %v282
    %v299 = vmax.f32 %v253, %v283
    %v300 = vmax.f32 %v258, %v284
    %v301 = vmax.f32 %v263, %v285
    %v302 = vmax.f32 %v268, %v286
    %v303 = vld [vmem:[#allocation5] sm:$0xff]
    %v304 = vld [vmem:[#allocation5 + $0x8] sm:$0xff]
    %v305 = vld [vmem:[#allocation5 + $0x10] sm:$0xff]
    %v306 = vld [vmem:[#allocation5 + $0x18] sm:$0xff]
    %v307 = vlaneseq
    %v308 = vshrl.u32 %v307, 7
    %v309 = vsub.s32 1, %v308
    %v310 = vrot.slane %v52, %v309
    %v312 = vsel %vm77, %v287, 0
    %v315 = vsel %vm77, %v288, 0
    %v318 = vsel %vm77, %v289, 0
    %v321 = vsel %vm77, %v290, 0
    %v324 = vsel %vm77, %v291, 0
    %v327 = vsel %vm77, %v292, 0
    %v330 = vsel %vm77, %v293, 0
    %v333 = vsel %vm77, %v294, 0
    %v336 = vsel %vm77, %v295, 0
    %v339 = vsel %vm77, %v296, 0
    %v342 = vsel %vm77, %v297, 0
    %v345 = vsel %vm77, %v298, 0
    %v348 = vsel %vm77, %v299, 0
    %v351 = vsel %vm77, %v300, 0
    %v354 = vsel %vm77, %v301, 0
    %v357 = vsel %vm77, %v302, 0
    %359 = vmatprep.subr.mxu0 0.0
    %360 = vmatpush1.msra.mxu0 %v303
    %361 = vmatprep.subr.mxu0 0.0
    %362 = vmatpush1.msra.mxu0 %v304
    %363 = vmatprep.subr.mxu0 0.0
    %364 = vmatpush1.msra.mxu0 %v305
    %365 = vmatprep.subr.mxu0 0.0
    %366 = vmatpush1.msra.mxu0 %v306
    %367 = vmatprep.subr.mxu0 0.0
    %368 = vmatpush1.msra.mxu0 0.0
    %369 = vmatprep.subr.mxu0 0.0
    %370 = vmatpush1.msra.mxu0 0.0
    %371 = vmatprep.subr.mxu0 0.0
    %372 = vmatpush1.msra.mxu0 0.0
    %373 = vmatprep.subr.mxu0 0.0
    %374 = vmatpush1.msra.mxu0 0.0
    %375 = vmatprep.subr.mxu0 0.0
    %376 = vmatpush1.msra.mxu0 0.0
    %377 = vmatprep.subr.mxu0 0.0
    %378 = vmatpush1.msra.mxu0 0.0
    %379 = vmatprep.subr.mxu0 0.0
    %380 = vmatpush1.msra.mxu0 0.0
    %381 = vmatprep.subr.mxu0 0.0
    %382 = vmatpush1.msra.mxu0 0.0
    %383 = vmatprep.subr.mxu0 0.0
    %384 = vmatpush1.msra.mxu0 0.0
    %385 = vmatprep.subr.mxu0 0.0
    %386 = vmatpush1.msra.mxu0 0.0
    %387 = vmatprep.subr.mxu0 0.0
    %388 = vmatpush1.msra.mxu0 0.0
    %389 = vmatprep.subr.mxu0 0.0
    %390 = vmatpush1.msra.mxu0 0.0
    %391 = vmatprep.subr.mxu0 0.0
    %392 = vmatpush1.msra.mxu0 0.0
    %393 = vmatprep.subr.mxu0 0.0
    %394 = vmatpush1.msra.mxu0 0.0
    %395 = vmatprep.subr.mxu0 0.0
    %396 = vmatpush1.msra.mxu0 0.0
    %397 = vmatprep.subr.mxu0 0.0
    %398 = vmatpush1.msra.mxu0 0.0
    %399 = vmatprep.subr.mxu0 0.0
    %400 = vmatpush1.msra.mxu0 0.0
    %401 = vmatprep.subr.mxu0 0.0
    %402 = vmatpush1.msra.mxu0 0.0
    %403 = vmatprep.subr.mxu0 0.0
    %404 = vmatpush1.msra.mxu0 0.0
    %405 = vmatprep.subr.mxu0 0.0
    %406 = vmatpush1.msra.mxu0 0.0
    %407 = vmatprep.subr.mxu0 0.0
    %408 = vmatpush1.msra.mxu0 0.0
    %409 = vmatprep.subr.mxu0 0.0
    %410 = vmatpush1.msra.mxu0 0.0
    %411 = vmatprep.subr.mxu0 0.0
    %412 = vmatpush1.msra.mxu0 0.0
    %413 = vmatprep.subr.mxu0 0.0
    %414 = vmatpush1.msra.mxu0 0.0
    %415 = vmatprep.subr.mxu0 0.0
    %416 = vmatpush1.msra.mxu0 0.0
    %417 = vmatprep.subr.mxu0 0.0
    %418 = vmatpush1.msra.mxu0 0.0
    %419 = vmatprep.subr.mxu0 0.0
    %420 = vmatpush1.msra.mxu0 0.0
    %421 = vmatprep.subr.mxu0 0.0
    %422 = vmatpush1.msra.mxu0 0.0
    %423 = vmatprep.mubr.f32.mxu0 0.0
    %424 = vmatmul.mubr.f32.gmra.mrb[0].mxu0 %v312
    %v425 = vpop.f32.mrb[0].mxu0
    %v426 = vadd.f32 %v310, %v425
    %v427 = vpop.f32.mrb[0].mxu0
    %428 = vmatprep.mubr.f32.mxu0 0.0
    %429 = vmatmul.mubr.f32.gmra.mrb[0].mxu0 %v315
    %v430 = vpop.f32.mrb[0].mxu0
    %v431 = vadd.f32 %v310, %v430
    %v432 = vpop.f32.mrb[0].mxu0
    %433 = vmatprep.mubr.f32.mxu0 0.0
    %434 = vmatmul.mubr.f32.gmra.mrb[0].mxu0 %v318
    %v435 = vpop.f32.mrb[0].mxu0
    %v436 = vadd.f32 %v310, %v435
    %v437 = vpop.f32.mrb[0].mxu0
    %438 = vmatprep.mubr.f32.mxu0 0.0
    %439 = vmatmul.mubr.f32.gmra.mrb[0].mxu0 %v321
    %v440 = vpop.f32.mrb[0].mxu0
    %v441 = vadd.f32 %v310, %v440
    %v442 = vpop.f32.mrb[0].mxu0
    %443 = vmatprep.mubr.f32.mxu0 0.0
    %444 = vmatmul.mubr.f32.gmra.mrb[0].mxu0 %v324
    %v445 = vpop.f32.mrb[0].mxu0
    %v446 = vadd.f32 %v310, %v445
    %v447 = vpop.f32.mrb[0].mxu0
    %448 = vmatprep.mubr.f32.mxu0 0.0
    %449 = vmatmul.mubr.f32.gmra.mrb[0].mxu0 %v327
    %v450 = vpop.f32.mrb[0].mxu0
    %v451 = vadd.f32 %v310, %v450
    %v452 = vpop.f32.mrb[0].mxu0
    %453 = vmatprep.mubr.f32.mxu0 0.0
    %454 = vmatmul.mubr.f32.gmra.mrb[0].mxu0 %v330
    %v455 = vpop.f32.mrb[0].mxu0
    %v456 = vadd.f32 %v310, %v455
    %v457 = vpop.f32.mrb[0].mxu0
    %458 = vmatprep.mubr.f32.mxu0 0.0
    %459 = vmatmul.mubr.f32.gmra.mrb[0].mxu0 %v333
    %v460 = vpop.f32.mrb[0].mxu0
    %v461 = vadd.f32 %v310, %v460
    %v462 = vpop.f32.mrb[0].mxu0
    %463 = vmatprep.mubr.f32.mxu0 0.0
    %464 = vmatmul.mubr.f32.gmra.mrb[0].mxu0 %v336
    %v465 = vpop.f32.mrb[0].mxu0
    %v466 = vadd.f32 %v310, %v465
    %v467 = vpop.f32.mrb[0].mxu0
    %468 = vmatprep.mubr.f32.mxu0 0.0
    %469 = vmatmul.mubr.f32.gmra.mrb[0].mxu0 %v339
    %v470 = vpop.f32.mrb[0].mxu0
    %v471 = vadd.f32 %v310, %v470
    %v472 = vpop.f32.mrb[0].mxu0
    %473 = vmatprep.mubr.f32.mxu0 0.0
    %474 = vmatmul.mubr.f32.gmra.mrb[0].mxu0 %v342
    %v475 = vpop.f32.mrb[0].mxu0
    %v476 = vadd.f32 %v310, %v475
    %v477 = vpop.f32.mrb[0].mxu0
    %478 = vmatprep.mubr.f32.mxu0 0.0
    %479 = vmatmul.mubr.f32.gmra.mrb[0].mxu0 %v345
    %v480 = vpop.f32.mrb[0].mxu0
    %v481 = vadd.f32 %v310, %v480
    %v482 = vpop.f32.mrb[0].mxu0
    %483 = vmatprep.mubr.f32.mxu0 0.0
    %484 = vmatmul.mubr.f32.gmra.mrb[0].mxu0 %v348
    %v485 = vpop.f32.mrb[0].mxu0
    %v486 = vadd.f32 %v310, %v485
    %v487 = vpop.f32.mrb[0].mxu0
    %488 = vmatprep.mubr.f32.mxu0 0.0
    %489 = vmatmul.mubr.f32.gmra.mrb[0].mxu0 %v351
    %v490 = vpop.f32.mrb[0].mxu0
    %v491 = vadd.f32 %v310, %v490
    %v492 = vpop.f32.mrb[0].mxu0
    %493 = vmatprep.mubr.f32.mxu0 0.0
    %494 = vmatmul.mubr.f32.gmra.mrb[0].mxu0 %v354
    %v495 = vpop.f32.mrb[0].mxu0
    %v496 = vadd.f32 %v310, %v495
    %v497 = vpop.f32.mrb[0].mxu0
    %498 = vmatprep.mubr.f32.mxu0 0.0
    %499 = vmatmul.mubr.f32.gmra.mrb[0].mxu0 %v357
    %v500 = vpop.f32.mrb[0].mxu0
    %v501 = vadd.f32 %v310, %v500
    %v502 = vpop.f32.mrb[0].mxu0
    %503 = vdwg.mxu0
    %v504 = vmul.f32 %v426, 0.01
    %v505 = vmul.f32 %v431, 0.01
    %v506 = vmul.f32 %v436, 0.01
    %v507 = vmul.f32 %v441, 0.01
    %v508 = vmul.f32 %v446, 0.01
    %v509 = vmul.f32 %v451, 0.01
    %v510 = vmul.f32 %v456, 0.01
    %v511 = vmul.f32 %v461, 0.01
    %v512 = vmul.f32 %v466, 0.01
    %v513 = vmul.f32 %v471, 0.01
    %v514 = vmul.f32 %v476, 0.01
    %v515 = vmul.f32 %v481, 0.01
    %v516 = vmul.f32 %v486, 0.01
    %v517 = vmul.f32 %v491, 0.01
    %v518 = vmul.f32 %v496, 0.01
    %v519 = vmul.f32 %v501, 0.01
    %v520 = vmax.f32 %v426, %v504
    %v521 = vmax.f32 %v431, %v505
    %v522 = vmax.f32 %v436, %v506
    %v523 = vmax.f32 %v441, %v507
    %v524 = vmax.f32 %v446, %v508
    %v525 = vmax.f32 %v451, %v509
    %v526 = vmax.f32 %v456, %v510
    %v527 = vmax.f32 %v461, %v511
    %v528 = vmax.f32 %v466, %v512
    %v529 = vmax.f32 %v471, %v513
    %v530 = vmax.f32 %v476, %v514
    %v531 = vmax.f32 %v481, %v515
    %v532 = vmax.f32 %v486, %v516
    %v533 = vmax.f32 %v491, %v517
    %v534 = vmax.f32 %v496, %v518
    %v535 = vmax.f32 %v501, %v519
    %v536 = vadd.f32 %v520, %v287
    %v537 = vadd.f32 %v521, %v288
    %v538 = vadd.f32 %v522, %v289
    %v539 = vadd.f32 %v523, %v290
    %v540 = vadd.f32 %v524, %v291
    %v541 = vadd.f32 %v525, %v292
    %v542 = vadd.f32 %v526, %v293
    %v543 = vadd.f32 %v527, %v294
    %v544 = vadd.f32 %v528, %v295
    %v545 = vadd.f32 %v529, %v296
    %v546 = vadd.f32 %v530, %v297
    %v547 = vadd.f32 %v531, %v298
    %v548 = vadd.f32 %v532, %v299
    %v549 = vadd.f32 %v533, %v300
    %v550 = vadd.f32 %v534, %v301
    %v551 = vadd.f32 %v535, %v302
    %s552 = scalar_lea.vmem [#allocation5], 32
    %v553 = vld [vmem:[%s552] sm:$0xff]
    %v554 = vld [vmem:[%s552 + $0x8] sm:$0xff]
    %v555 = vld [vmem:[%s552 + $0x10] sm:$0xff]
    %v556 = vld [vmem:[%s552 + $0x18] sm:$0xff]
    %v557 = vlaneseq
    %v558 = vshrl.u32 %v557, 7
    %v559 = vsub.s32 2, %v558
    %v560 = vrot.slane %v52, %v559
    %v562 = vsel %vm77, %v536, 0
    %v565 = vsel %vm77, %v537, 0
    %v568 = vsel %vm77, %v538, 0
    %v571 = vsel %vm77, %v539, 0
    %v574 = vsel %vm77, %v540, 0
    %v577 = vsel %vm77, %v541, 0
    %v580 = vsel %vm77, %v542, 0
    %v583 = vsel %vm77, %v543, 0
    %v586 = vsel %vm77, %v544, 0
    %v589 = vsel %vm77, %v545, 0
    %v592 = vsel %vm77, %v546, 0
    %v595 = vsel %vm77, %v547, 0
    %v598 = vsel %vm77, %v548, 0
    %v601 = vsel %vm77, %v549, 0
    %v604 = vsel %vm77, %v550, 0
    %v607 = vsel %vm77, %v551, 0
    %609 = vmatprep.subr.mxu0 0.0
    %610 = vmatpush1.msra.mxu0 %v553
    %611 = vmatprep.subr.mxu0 0.0
    %612 = vmatpush1.msra.mxu0 %v554
    %613 = vmatprep.subr.mxu0 0.0
    %614 = vmatpush1.msra.mxu0 %v555
    %615 = vmatprep.subr.mxu0 0.0
    %616 = vmatpush1.msra.mxu0 %v556
    %617 = vmatprep.subr.mxu0 0.0
    %618 = vmatpush1.msra.mxu0 0.0
    %619 = vmatprep.subr.mxu0 0.0
    %620 = vmatpush1.msra.mxu0 0.0
    %621 = vmatprep.subr.mxu0 0.0
    %622 = vmatpush1.msra.mxu0 0.0
    %623 = vmatprep.subr.mxu0 0.0
    %624 = vmatpush1.msra.mxu0 0.0
    %625 = vmatprep.subr.mxu0 0.0
    %626 = vmatpush1.msra.mxu0 0.0
    %627 = vmatprep.subr.mxu0 0.0
    %628 = vmatpush1.msra.mxu0 0.0
    %629 = vmatprep.subr.mxu0 0.0
    %630 = vmatpush1.msra.mxu0 0.0
    %631 = vmatprep.subr.mxu0 0.0
    %632 = vmatpush1.msra.mxu0 0.0
    %633 = vmatprep.subr.mxu0 0.0
    %634 = vmatpush1.msra.mxu0 0.0
    %635 = vmatprep.subr.mxu0 0.0
    %636 = vmatpush1.msra.mxu0 0.0
    %637 = vmatprep.subr.mxu0 0.0
    %638 = vmatpush1.msra.mxu0 0.0
    %639 = vmatprep.subr.mxu0 0.0
    %640 = vmatpush1.msra.mxu0 0.0
    %641 = vmatprep.subr.mxu0 0.0
    %642 = vmatpush1.msra.mxu0 0.0
    %643 = vmatprep.subr.mxu0 0.0
    %644 = vmatpush1.msra.mxu0 0.0
    %645 = vmatprep.subr.mxu0 0.0
    %646 = vmatpush1.msra.mxu0 0.0
    %647 = vmatprep.subr.mxu0 0.0
    %648 = vmatpush1.msra.mxu0 0.0
    %649 = vmatprep.subr.mxu0 0.0
    %650 = vmatpush1.msra.mxu0 0.0
    %651 = vmatprep.subr.mxu0 0.0
    %652 = vmatpush1.msra.mxu0 0.0
    %653 = vmatprep.subr.mxu0 0.0
    %654 = vmatpush1.msra.mxu0 0.0
    %655 = vmatprep.subr.mxu0 0.0
    %656 = vmatpush1.msra.mxu0 0.0
    %657 = vmatprep.subr.mxu0 0.0
    %658 = vmatpush1.msra.mxu0 0.0
    %659 = vmatprep.subr.mxu0 0.0
    %660 = vmatpush1.msra.mxu0 0.0
    %661 = vmatprep.subr.mxu0 0.0
    %662 = vmatpush1.msra.mxu0 0.0
    %663 = vmatprep.subr.mxu0 0.0
    %664 = vmatpush1.msra.mxu0 0.0
    %665 = vmatprep.subr.mxu0 0.0
    %666 = vmatpush1.msra.mxu0 0.0
    %667 = vmatprep.subr.mxu0 0.0
    %668 = vmatpush1.msra.mxu0 0.0
    %669 = vmatprep.subr.mxu0 0.0
    %670 = vmatpush1.msra.mxu0 0.0
    %671 = vmatprep.subr.mxu0 0.0
    %672 = vmatpush1.msra.mxu0 0.0
    %673 = vmatprep.mubr.f32.mxu0 0.0
    %674 = vmatmul.mubr.f32.gmra.mrb[0].mxu0 %v562
    %v675 = vpop.f32.mrb[0].mxu0
    %v676 = vadd.f32 %v560, %v675
    %v677 = vpop.f32.mrb[0].mxu0
    %678 = vmatprep.mubr.f32.mxu0 0.0
    %679 = vmatmul.mubr.f32.gmra.mrb[0].mxu0 %v565
    %v680 = vpop.f32.mrb[0].mxu0
    %v681 = vadd.f32 %v560, %v680
    %v682 = vpop.f32.mrb[0].mxu0
    %683 = vmatprep.mubr.f32.mxu0 0.0
    %684 = vmatmul.mubr.f32.gmra.mrb[0].mxu0 %v568
    %v685 = vpop.f32.mrb[0].mxu0
    %v686 = vadd.f32 %v560, %v685
    %v687 = vpop.f32.mrb[0].mxu0
    %688 = vmatprep.mubr.f32.mxu0 0.0
    %689 = vmatmul.mubr.f32.gmra.mrb[0].mxu0 %v571
    %v690 = vpop.f32.mrb[0].mxu0
    %v691 = vadd.f32 %v560, %v690
    %v692 = vpop.f32.mrb[0].mxu0
    %693 = vmatprep.mubr.f32.mxu0 0.0
    %694 = vmatmul.mubr.f32.gmra.mrb[0].mxu0 %v574
    %v695 = vpop.f32.mrb[0].mxu0
    %v696 = vadd.f32 %v560, %v695
    %v697 = vpop.f32.mrb[0].mxu0
    %698 = vmatprep.mubr.f32.mxu0 0.0
    %699 = vmatmul.mubr.f32.gmra.mrb[0].mxu0 %v577
    %v700 = vpop.f32.mrb[0].mxu0
    %v701 = vadd.f32 %v560, %v700
    %v702 = vpop.f32.mrb[0].mxu0
    %703 = vmatprep.mubr.f32.mxu0 0.0
    %704 = vmatmul.mubr.f32.gmra.mrb[0].mxu0 %v580
    %v705 = vpop.f32.mrb[0].mxu0
    %v706 = vadd.f32 %v560, %v705
    %v707 = vpop.f32.mrb[0].mxu0
    %708 = vmatprep.mubr.f32.mxu0 0.0
    %709 = vmatmul.mubr.f32.gmra.mrb[0].mxu0 %v583
    %v710 = vpop.f32.mrb[0].mxu0
    %v711 = vadd.f32 %v560, %v710
    %v712 = vpop.f32.mrb[0].mxu0
    %713 = vmatprep.mubr.f32.mxu0 0.0
    %714 = vmatmul.mubr.f32.gmra.mrb[0].mxu0 %v586
    %v715 = vpop.f32.mrb[0].mxu0
    %v716 = vadd.f32 %v560, %v715
    %v717 = vpop.f32.mrb[0].mxu0
    %718 = vmatprep.mubr.f32.mxu0 0.0
    %719 = vmatmul.mubr.f32.gmra.mrb[0].mxu0 %v589
    %v720 = vpop.f32.mrb[0].mxu0
    %v721 = vadd.f32 %v560, %v720
    %v722 = vpop.f32.mrb[0].mxu0
    %723 = vmatprep.mubr.f32.mxu0 0.0
    %724 = vmatmul.mubr.f32.gmra.mrb[0].mxu0 %v592
    %v725 = vpop.f32.mrb[0].mxu0
    %v726 = vadd.f32 %v560, %v725
    %v727 = vpop.f32.mrb[0].mxu0
    %728 = vmatprep.mubr.f32.mxu0 0.0
    %729 = vmatmul.mubr.f32.gmra.mrb[0].mxu0 %v595
    %v730 = vpop.f32.mrb[0].mxu0
    %v731 = vadd.f32 %v560, %v730
    %v732 = vpop.f32.mrb[0].mxu0
    %733 = vmatprep.mubr.f32.mxu0 0.0
    %734 = vmatmul.mubr.f32.gmra.mrb[0].mxu0 %v598
    %v735 = vpop.f32.mrb[0].mxu0
    %v736 = vadd.f32 %v560, %v735
    %v737 = vpop.f32.mrb[0].mxu0
    %738 = vmatprep.mubr.f32.mxu0 0.0
    %739 = vmatmul.mubr.f32.gmra.mrb[0].mxu0 %v601
    %v740 = vpop.f32.mrb[0].mxu0
    %v741 = vadd.f32 %v560, %v740
    %v742 = vpop.f32.mrb[0].mxu0
    %743 = vmatprep.mubr.f32.mxu0 0.0
    %744 = vmatmul.mubr.f32.gmra.mrb[0].mxu0 %v604
    %v745 = vpop.f32.mrb[0].mxu0
    %v746 = vadd.f32 %v560, %v745
    %v747 = vpop.f32.mrb[0].mxu0
    %748 = vmatprep.mubr.f32.mxu0 0.0
    %749 = vmatmul.mubr.f32.gmra.mrb[0].mxu0 %v607
    %v750 = vpop.f32.mrb[0].mxu0
    %v751 = vadd.f32 %v560, %v750
    %v752 = vpop.f32.mrb[0].mxu0
    %753 = vdwg.mxu0
    %v754 = vmul.f32 %v676, 0.01
    %v755 = vmul.f32 %v681, 0.01
    %v756 = vmul.f32 %v686, 0.01
    %v757 = vmul.f32 %v691, 0.01
    %v758 = vmul.f32 %v696, 0.01
    %v759 = vmul.f32 %v701, 0.01
    %v760 = vmul.f32 %v706, 0.01
    %v761 = vmul.f32 %v711, 0.01
    %v762 = vmul.f32 %v716, 0.01
    %v763 = vmul.f32 %v721, 0.01
    %v764 = vmul.f32 %v726, 0.01
    %v765 = vmul.f32 %v731, 0.01
    %v766 = vmul.f32 %v736, 0.01
    %v767 = vmul.f32 %v741, 0.01
    %v768 = vmul.f32 %v746, 0.01
    %v769 = vmul.f32 %v751, 0.01
    %v770 = vmax.f32 %v676, %v754
    %v771 = vmax.f32 %v681, %v755
    %v772 = vmax.f32 %v686, %v756
    %v773 = vmax.f32 %v691, %v757
    %v774 = vmax.f32 %v696, %v758
    %v775 = vmax.f32 %v701, %v759
    %v776 = vmax.f32 %v706, %v760
    %v777 = vmax.f32 %v711, %v761
    %v778 = vmax.f32 %v716, %v762
    %v779 = vmax.f32 %v721, %v763
    %v780 = vmax.f32 %v726, %v764
    %v781 = vmax.f32 %v731, %v765
    %v782 = vmax.f32 %v736, %v766
    %v783 = vmax.f32 %v741, %v767
    %v784 = vmax.f32 %v746, %v768
    %v785 = vmax.f32 %v751, %v769
    %v786 = vadd.f32 %v770, %v536
    %v787 = vadd.f32 %v771, %v537
    %v788 = vadd.f32 %v772, %v538
    %v789 = vadd.f32 %v773, %v539
    %v790 = vadd.f32 %v774, %v540
    %v791 = vadd.f32 %v775, %v541
    %v792 = vadd.f32 %v776, %v542
    %v793 = vadd.f32 %v777, %v543
    %v794 = vadd.f32 %v778, %v544
    %v795 = vadd.f32 %v779, %v545
    %v796 = vadd.f32 %v780, %v546
    %v797 = vadd.f32 %v781, %v547
    %v798 = vadd.f32 %v782, %v548
    %v799 = vadd.f32 %v783, %v549
    %v800 = vadd.f32 %v784, %v550
    %v801 = vadd.f32 %v785, %v551
    %s802 = scalar_lea.vmem [#allocation5], 64
    %v803 = vld [vmem:[%s802] sm:$0xff]
    %v804 = vld [vmem:[%s802 + $0x8] sm:$0xff]
    %v805 = vld [vmem:[%s802 + $0x10] sm:$0xff]
    %v806 = vld [vmem:[%s802 + $0x18] sm:$0xff]
    %v807 = vlaneseq
    %v808 = vshrl.u32 %v807, 7
    %v809 = vsub.s32 3, %v808
    %v810 = vrot.slane %v52, %v809
    %v812 = vsel %vm77, %v786, 0
    %v815 = vsel %vm77, %v787, 0
    %v818 = vsel %vm77, %v788, 0
    %v821 = vsel %vm77, %v789, 0
    %v824 = vsel %vm77, %v790, 0
    %v827 = vsel %vm77, %v791, 0
    %v830 = vsel %vm77, %v792, 0
    %v833 = vsel %vm77, %v793, 0
    %v836 = vsel %vm77, %v794, 0
    %v839 = vsel %vm77, %v795, 0
    %v842 = vsel %vm77, %v796, 0
    %v845 = vsel %vm77, %v797, 0
    %v848 = vsel %vm77, %v798, 0
    %v851 = vsel %vm77, %v799, 0
    %v854 = vsel %vm77, %v800, 0
    %v857 = vsel %vm77, %v801, 0
    %859 = vmatprep.subr.mxu0 0.0
    %860 = vmatpush1.msra.mxu0 %v803
    %861 = vmatprep.subr.mxu0 0.0
    %862 = vmatpush1.msra.mxu0 %v804
    %863 = vmatprep.subr.mxu0 0.0
    %864 = vmatpush1.msra.mxu0 %v805
    %865 = vmatprep.subr.mxu0 0.0
    %866 = vmatpush1.msra.mxu0 %v806
    %867 = vmatprep.subr.mxu0 0.0
    %868 = vmatpush1.msra.mxu0 0.0
    %869 = vmatprep.subr.mxu0 0.0
    %870 = vmatpush1.msra.mxu0 0.0
    %871 = vmatprep.subr.mxu0 0.0
    %872 = vmatpush1.msra.mxu0 0.0
    %873 = vmatprep.subr.mxu0 0.0
    %874 = vmatpush1.msra.mxu0 0.0
    %875 = vmatprep.subr.mxu0 0.0
    %876 = vmatpush1.msra.mxu0 0.0
    %877 = vmatprep.subr.mxu0 0.0
    %878 = vmatpush1.msra.mxu0 0.0
    %879 = vmatprep.subr.mxu0 0.0
    %880 = vmatpush1.msra.mxu0 0.0
    %881 = vmatprep.subr.mxu0 0.0
    %882 = vmatpush1.msra.mxu0 0.0
    %883 = vmatprep.subr.mxu0 0.0
    %884 = vmatpush1.msra.mxu0 0.0
    %885 = vmatprep.subr.mxu0 0.0
    %886 = vmatpush1.msra.mxu0 0.0
    %887 = vmatprep.subr.mxu0 0.0
    %888 = vmatpush1.msra.mxu0 0.0
    %889 = vmatprep.subr.mxu0 0.0
    %890 = vmatpush1.msra.mxu0 0.0
    %891 = vmatprep.subr.mxu0 0.0
    %892 = vmatpush1.msra.mxu0 0.0
    %893 = vmatprep.subr.mxu0 0.0
    %894 = vmatpush1.msra.mxu0 0.0
    %895 = vmatprep.subr.mxu0 0.0
    %896 = vmatpush1.msra.mxu0 0.0
    %897 = vmatprep.subr.mxu0 0.0
    %898 = vmatpush1.msra.mxu0 0.0
    %899 = vmatprep.subr.mxu0 0.0
    %900 = vmatpush1.msra.mxu0 0.0
    %901 = vmatprep.subr.mxu0 0.0
    %902 = vmatpush1.msra.mxu0 0.0
    %903 = vmatprep.subr.mxu0 0.0
    %904 = vmatpush1.msra.mxu0 0.0
    %905 = vmatprep.subr.mxu0 0.0
    %906 = vmatpush1.msra.mxu0 0.0
    %907 = vmatprep.subr.mxu0 0.0
    %908 = vmatpush1.msra.mxu0 0.0
    %909 = vmatprep.subr.mxu0 0.0
    %910 = vmatpush1.msra.mxu0 0.0
    %911 = vmatprep.subr.mxu0 0.0
    %912 = vmatpush1.msra.mxu0 0.0
    %913 = vmatprep.subr.mxu0 0.0
    %914 = vmatpush1.msra.mxu0 0.0
    %915 = vmatprep.subr.mxu0 0.0
    %916 = vmatpush1.msra.mxu0 0.0
    %917 = vmatprep.subr.mxu0 0.0
    %918 = vmatpush1.msra.mxu0 0.0
    %919 = vmatprep.subr.mxu0 0.0
    %920 = vmatpush1.msra.mxu0 0.0
    %921 = vmatprep.subr.mxu0 0.0
    %922 = vmatpush1.msra.mxu0 0.0
    %923 = vmatprep.mubr.f32.mxu0 0.0
    %924 = vmatmul.mubr.f32.gmra.mrb[0].mxu0 %v812
    %v925 = vpop.f32.mrb[0].mxu0
    %v926 = vadd.f32 %v810, %v925
    %v927 = vpop.f32.mrb[0].mxu0
    %928 = vmatprep.mubr.f32.mxu0 0.0
    %929 = vmatmul.mubr.f32.gmra.mrb[0].mxu0 %v815
    %v930 = vpop.f32.mrb[0].mxu0
    %v931 = vadd.f32 %v810, %v930
    %v932 = vpop.f32.mrb[0].mxu0
    %933 = vmatprep.mubr.f32.mxu0 0.0
    %934 = vmatmul.mubr.f32.gmra.mrb[0].mxu0 %v818
    %v935 = vpop.f32.mrb[0].mxu0
    %v936 = vadd.f32 %v810, %v935
    %v937 = vpop.f32.mrb[0].mxu0
    %938 = vmatprep.mubr.f32.mxu0 0.0
    %939 = vmatmul.mubr.f32.gmra.mrb[0].mxu0 %v821
    %v940 = vpop.f32.mrb[0].mxu0
    %v941 = vadd.f32 %v810, %v940
    %v942 = vpop.f32.mrb[0].mxu0
    %943 = vmatprep.mubr.f32.mxu0 0.0
    %944 = vmatmul.mubr.f32.gmra.mrb[0].mxu0 %v824
    %v945 = vpop.f32.mrb[0].mxu0
    %v946 = vadd.f32 %v810, %v945
    %v947 = vpop.f32.mrb[0].mxu0
    %948 = vmatprep.mubr.f32.mxu0 0.0
    %949 = vmatmul.mubr.f32.gmra.mrb[0].mxu0 %v827
    %v950 = vpop.f32.mrb[0].mxu0
    %v951 = vadd.f32 %v810, %v950
    %v952 = vpop.f32.mrb[0].mxu0
    %953 = vmatprep.mubr.f32.mxu0 0.0
    %954 = vmatmul.mubr.f32.gmra.mrb[0].mxu0 %v830
    %v955 = vpop.f32.mrb[0].mxu0
    %v956 = vadd.f32 %v810, %v955
    %v957 = vpop.f32.mrb[0].mxu0
    %958 = vmatprep.mubr.f32.mxu0 0.0
    %959 = vmatmul.mubr.f32.gmra.mrb[0].mxu0 %v833
    %v960 = vpop.f32.mrb[0].mxu0
    %v961 = vadd.f32 %v810, %v960
    %v962 = vpop.f32.mrb[0].mxu0
    %963 = vmatprep.mubr.f32.mxu0 0.0
    %964 = vmatmul.mubr.f32.gmra.mrb[0].mxu0 %v836
    %v965 = vpop.f32.mrb[0].mxu0
    %v966 = vadd.f32 %v810, %v965
    %v967 = vpop.f32.mrb[0].mxu0
    %968 = vmatprep.mubr.f32.mxu0 0.0
    %969 = vmatmul.mubr.f32.gmra.mrb[0].mxu0 %v839
    %v970 = vpop.f32.mrb[0].mxu0
    %v971 = vadd.f32 %v810, %v970
    %v972 = vpop.f32.mrb[0].mxu0
    %973 = vmatprep.mubr.f32.mxu0 0.0
    %974 = vmatmul.mubr.f32.gmra.mrb[0].mxu0 %v842
    %v975 = vpop.f32.mrb[0].mxu0
    %v976 = vadd.f32 %v810, %v975
    %v977 = vpop.f32.mrb[0].mxu0
    %978 = vmatprep.mubr.f32.mxu0 0.0
    %979 = vmatmul.mubr.f32.gmra.mrb[0].mxu0 %v845
    %v980 = vpop.f32.mrb[0].mxu0
    %v981 = vadd.f32 %v810, %v980
    %v982 = vpop.f32.mrb[0].mxu0
    %983 = vmatprep.mubr.f32.mxu0 0.0
    %984 = vmatmul.mubr.f32.gmra.mrb[0].mxu0 %v848
    %v985 = vpop.f32.mrb[0].mxu0
    %v986 = vadd.f32 %v810, %v985
    %v987 = vpop.f32.mrb[0].mxu0
    %988 = vmatprep.mubr.f32.mxu0 0.0
    %989 = vmatmul.mubr.f32.gmra.mrb[0].mxu0 %v851
    %v990 = vpop.f32.mrb[0].mxu0
    %v991 = vadd.f32 %v810, %v990
    %v992 = vpop.f32.mrb[0].mxu0
    %993 = vmatprep.mubr.f32.mxu0 0.0
    %994 = vmatmul.mubr.f32.gmra.mrb[0].mxu0 %v854
    %v995 = vpop.f32.mrb[0].mxu0
    %v996 = vadd.f32 %v810, %v995
    %v997 = vpop.f32.mrb[0].mxu0
    %998 = vmatprep.mubr.f32.mxu0 0.0
    %999 = vmatmul.mubr.f32.gmra.mrb[0].mxu0 %v857
    %v1000 = vpop.f32.mrb[0].mxu0
    %v1001 = vadd.f32 %v810, %v1000
    %v1002 = vpop.f32.mrb[0].mxu0
    %1003 = vdwg.mxu0
    %v1004 = vmul.f32 %v926, 0.01
    %v1005 = vmul.f32 %v931, 0.01
    %v1006 = vmul.f32 %v936, 0.01
    %v1007 = vmul.f32 %v941, 0.01
    %v1008 = vmul.f32 %v946, 0.01
    %v1009 = vmul.f32 %v951, 0.01
    %v1010 = vmul.f32 %v956, 0.01
    %v1011 = vmul.f32 %v961, 0.01
    %v1012 = vmul.f32 %v966, 0.01
    %v1013 = vmul.f32 %v971, 0.01
    %v1014 = vmul.f32 %v976, 0.01
    %v1015 = vmul.f32 %v981, 0.01
    %v1016 = vmul.f32 %v986, 0.01
    %v1017 = vmul.f32 %v991, 0.01
    %v1018 = vmul.f32 %v996, 0.01
    %v1019 = vmul.f32 %v1001, 0.01
    %v1020 = vmax.f32 %v926, %v1004
    %v1021 = vmax.f32 %v931, %v1005
    %v1022 = vmax.f32 %v936, %v1006
    %v1023 = vmax.f32 %v941, %v1007
    %v1024 = vmax.f32 %v946, %v1008
    %v1025 = vmax.f32 %v951, %v1009
    %v1026 = vmax.f32 %v956, %v1010
    %v1027 = vmax.f32 %v961, %v1011
    %v1028 = vmax.f32 %v966, %v1012
    %v1029 = vmax.f32 %v971, %v1013
    %v1030 = vmax.f32 %v976, %v1014
    %v1031 = vmax.f32 %v981, %v1015
    %v1032 = vmax.f32 %v986, %v1016
    %v1033 = vmax.f32 %v991, %v1017
    %v1034 = vmax.f32 %v996, %v1018
    %v1035 = vmax.f32 %v1001, %v1019
    %v1036 = vadd.f32 %v1020, %v786
    %v1037 = vadd.f32 %v1021, %v787
    %v1038 = vadd.f32 %v1022, %v788
    %v1039 = vadd.f32 %v1023, %v789
    %v1040 = vadd.f32 %v1024, %v790
    %v1041 = vadd.f32 %v1025, %v791
    %v1042 = vadd.f32 %v1026, %v792
    %v1043 = vadd.f32 %v1027, %v793
    %v1044 = vadd.f32 %v1028, %v794
    %v1045 = vadd.f32 %v1029, %v795
    %v1046 = vadd.f32 %v1030, %v796
    %v1047 = vadd.f32 %v1031, %v797
    %v1048 = vadd.f32 %v1032, %v798
    %v1049 = vadd.f32 %v1033, %v799
    %v1050 = vadd.f32 %v1034, %v800
    %v1051 = vadd.f32 %v1035, %v801
    %v1052 = vld [vmem:[%s1] sm:$0xff]
    %1053 = vmatprep.subr.mxu0 0.0
    %1054 = vmatpush1.msra.mxu0 %v1036
    %1055 = vmatprep.subr.mxu0 0.0
    %1056 = vmatpush1.msra.mxu0 %v1037
    %1057 = vmatprep.subr.mxu0 0.0
    %1058 = vmatpush1.msra.mxu0 %v1038
    %1059 = vmatprep.subr.mxu0 0.0
    %1060 = vmatpush1.msra.mxu0 %v1039
    %1061 = vmatprep.subr.mxu0 0.0
    %1062 = vmatpush1.msra.mxu0 %v1040
    %1063 = vmatprep.subr.mxu0 0.0
    %1064 = vmatpush1.msra.mxu0 %v1041
    %1065 = vmatprep.subr.mxu0 0.0
    %1066 = vmatpush1.msra.mxu0 %v1042
    %1067 = vmatprep.subr.mxu0 0.0
    %1068 = vmatpush1.msra.mxu0 %v1043
    %1069 = vmatprep.subr.mxu0 0.0
    %1070 = vmatpush1.msra.mxu0 %v1044
    %1071 = vmatprep.subr.mxu0 0.0
    %1072 = vmatpush1.msra.mxu0 %v1045
    %1073 = vmatprep.subr.mxu0 0.0
    %1074 = vmatpush1.msra.mxu0 %v1046
    %1075 = vmatprep.subr.mxu0 0.0
    %1076 = vmatpush1.msra.mxu0 %v1047
    %1077 = vmatprep.subr.mxu0 0.0
    %1078 = vmatpush1.msra.mxu0 %v1048
    %1079 = vmatprep.subr.mxu0 0.0
    %1080 = vmatpush1.msra.mxu0 %v1049
    %1081 = vmatprep.subr.mxu0 0.0
    %1082 = vmatpush1.msra.mxu0 %v1050
    %1083 = vmatprep.subr.mxu0 0.0
    %1084 = vmatpush1.msra.mxu0 %v1051
    %1085 = vmatprep.subr.mxu0 0.0
    %1086 = vmatpush1.msra.mxu0 0.0
    %1087 = vmatprep.subr.mxu0 0.0
    %1088 = vmatpush1.msra.mxu0 0.0
    %1089 = vmatprep.subr.mxu0 0.0
    %1090 = vmatpush1.msra.mxu0 0.0
    %1091 = vmatprep.subr.mxu0 0.0
    %1092 = vmatpush1.msra.mxu0 0.0
    %1093 = vmatprep.subr.mxu0 0.0
    %1094 = vmatpush1.msra.mxu0 0.0
    %1095 = vmatprep.subr.mxu0 0.0
    %1096 = vmatpush1.msra.mxu0 0.0
    %1097 = vmatprep.subr.mxu0 0.0
    %1098 = vmatpush1.msra.mxu0 0.0
    %1099 = vmatprep.subr.mxu0 0.0
    %1100 = vmatpush1.msra.mxu0 0.0
    %1101 = vmatprep.subr.mxu0 0.0
    %1102 = vmatpush1.msra.mxu0 0.0
    %1103 = vmatprep.subr.mxu0 0.0
    %1104 = vmatpush1.msra.mxu0 0.0
    %1105 = vmatprep.subr.mxu0 0.0
    %1106 = vmatpush1.msra.mxu0 0.0
    %1107 = vmatprep.subr.mxu0 0.0
    %1108 = vmatpush1.msra.mxu0 0.0
    %1109 = vmatprep.subr.mxu0 0.0
    %1110 = vmatpush1.msra.mxu0 0.0
    %1111 = vmatprep.subr.mxu0 0.0
    %1112 = vmatpush1.msra.mxu0 0.0
    %1113 = vmatprep.subr.mxu0 0.0
    %1114 = vmatpush1.msra.mxu0 0.0
    %1115 = vmatprep.subr.mxu0 0.0
    %1116 = vmatpush1.msra.mxu0 0.0
    %1117 = vmatprep.mubr.f32.mxu0 0.0
    %1118 = vmatmul.mubr.f32.gmra.mrb[0].mxu0 %v1052
    %v1119 = vpop.f32.mrb[0].mxu0
    %v1120 = vadd.f32 0.0, %v1119
    %v1121 = vpop.f32.mrb[0].mxu0
    %1122 = vdwg.mxu0
    %v1123 = vmul.f32 %v1120, 0.11111111
    %s1124 = scalar_lea.vmem [#allocation5], 96
    %v1125 = vld [vmem:[%s1124] sm:$0xff]
    %v1126 = vld [vmem:[%s1124 + $0x8] sm:$0xff]
    %v1127 = vld [vmem:[%s1124 + $0x10] sm:$0xff]
    %v1128 = vld [vmem:[%s1124 + $0x18] sm:$0xff]
    %v1129 = vlaneseq
    %v1130 = vshrl.u32 %v1129, 7
    %v1131 = vsub.s32 4, %v1130
    %v1132 = vrot.slane %v52, %v1131
    %v1134 = vsel %vm77, %v1123, 0
    %1136 = vmatprep.subr.mxu0 0.0
    %1137 = vmatpush1.msra.mxu0 %v1125
    %1138 = vmatprep.subr.mxu0 0.0
    %1139 = vmatpush1.msra.mxu0 %v1126
    %1140 = vmatprep.subr.mxu0 0.0
    %1141 = vmatpush1.msra.mxu0 %v1127
    %1142 = vmatprep.subr.mxu0 0.0
    %1143 = vmatpush1.msra.mxu0 %v1128
    %1144 = vmatprep.subr.mxu0 0.0
    %1145 = vmatpush1.msra.mxu0 0.0
    %1146 = vmatprep.subr.mxu0 0.0
    %1147 = vmatpush1.msra.mxu0 0.0
    %1148 = vmatprep.subr.mxu0 0.0
    %1149 = vmatpush1.msra.mxu0 0.0
    %1150 = vmatprep.subr.mxu0 0.0
    %1151 = vmatpush1.msra.mxu0 0.0
    %1152 = vmatprep.subr.mxu0 0.0
    %1153 = vmatpush1.msra.mxu0 0.0
    %1154 = vmatprep.subr.mxu0 0.0
    %1155 = vmatpush1.msra.mxu0 0.0
    %1156 = vmatprep.subr.mxu0 0.0
    %1157 = vmatpush1.msra.mxu0 0.0
    %1158 = vmatprep.subr.mxu0 0.0
    %1159 = vmatpush1.msra.mxu0 0.0
    %1160 = vmatprep.subr.mxu0 0.0
    %1161 = vmatpush1.msra.mxu0 0.0
    %1162 = vmatprep.subr.mxu0 0.0
    %1163 = vmatpush1.msra.mxu0 0.0
    %1164 = vmatprep.subr.mxu0 0.0
    %1165 = vmatpush1.msra.mxu0 0.0
    %1166 = vmatprep.subr.mxu0 0.0
    %1167 = vmatpush1.msra.mxu0 0.0
    %1168 = vmatprep.subr.mxu0 0.0
    %1169 = vmatpush1.msra.mxu0 0.0
    %1170 = vmatprep.subr.mxu0 0.0
    %1171 = vmatpush1.msra.mxu0 0.0
    %1172 = vmatprep.subr.mxu0 0.0
    %1173 = vmatpush1.msra.mxu0 0.0
    %1174 = vmatprep.subr.mxu0 0.0
    %1175 = vmatpush1.msra.mxu0 0.0
    %1176 = vmatprep.subr.mxu0 0.0
    %1177 = vmatpush1.msra.mxu0 0.0
    %1178 = vmatprep.subr.mxu0 0.0
    %1179 = vmatpush1.msra.mxu0 0.0
    %1180 = vmatprep.subr.mxu0 0.0
    %1181 = vmatpush1.msra.mxu0 0.0
    %1182 = vmatprep.subr.mxu0 0.0
    %1183 = vmatpush1.msra.mxu0 0.0
    %1184 = vmatprep.subr.mxu0 0.0
    %1185 = vmatpush1.msra.mxu0 0.0
    %1186 = vmatprep.subr.mxu0 0.0
    %1187 = vmatpush1.msra.mxu0 0.0
    %1188 = vmatprep.subr.mxu0 0.0
    %1189 = vmatpush1.msra.mxu0 0.0
    %1190 = vmatprep.subr.mxu0 0.0
    %1191 = vmatpush1.msra.mxu0 0.0
    %1192 = vmatprep.subr.mxu0 0.0
    %1193 = vmatpush1.msra.mxu0 0.0
    %1194 = vmatprep.subr.mxu0 0.0
    %1195 = vmatpush1.msra.mxu0 0.0
    %1196 = vmatprep.subr.mxu0 0.0
    %1197 = vmatpush1.msra.mxu0 0.0
    %1198 = vmatprep.subr.mxu0 0.0
    %1199 = vmatpush1.msra.mxu0 0.0
    %1200 = vmatprep.mubr.f32.mxu0 0.0
    %1201 = vmatmul.mubr.f32.gmra.mrb[0].mxu0 %v1134
    %v1202 = vpop.f32.mrb[0].mxu0
    %v1203 = vadd.f32 %v1132, %v1202
    %v1204 = vpop.f32.mrb[0].mxu0
    %1205 = vdwg.mxu0
    %v1206 = vmul.f32 %v1203, 0.01
    %v1207 = vmax.f32 %v1203, %v1206
    %v1208 = vadd.f32 %v1207, %v1123
    %s1209 = scalar_lea.vmem [#allocation5], 128
    %v1210 = vld [vmem:[%s1209] sm:$0xff]
    %v1211 = vld [vmem:[%s1209 + $0x8] sm:$0xff]
    %v1212 = vld [vmem:[%s1209 + $0x10] sm:$0xff]
    %v1213 = vld [vmem:[%s1209 + $0x18] sm:$0xff]
    %v1214 = vlaneseq
    %v1215 = vshrl.u32 %v1214, 7
    %v1216 = vsub.s32 5, %v1215
    %v1217 = vrot.slane %v52, %v1216
    %v1219 = vsel %vm77, %v1208, 0
    %1221 = vmatprep.subr.mxu0 0.0
    %1222 = vmatpush1.msra.mxu0 %v1210
    %1223 = vmatprep.subr.mxu0 0.0
    %1224 = vmatpush1.msra.mxu0 %v1211
    %1225 = vmatprep.subr.mxu0 0.0
    %1226 = vmatpush1.msra.mxu0 %v1212
    %1227 = vmatprep.subr.mxu0 0.0
    %1228 = vmatpush1.msra.mxu0 %v1213
    %1229 = vmatprep.subr.mxu0 0.0
    %1230 = vmatpush1.msra.mxu0 0.0
    %1231 = vmatprep.subr.mxu0 0.0
    %1232 = vmatpush1.msra.mxu0 0.0
    %1233 = vmatprep.subr.mxu0 0.0
    %1234 = vmatpush1.msra.mxu0 0.0
    %1235 = vmatprep.subr.mxu0 0.0
    %1236 = vmatpush1.msra.mxu0 0.0
    %1237 = vmatprep.subr.mxu0 0.0
    %1238 = vmatpush1.msra.mxu0 0.0
    %1239 = vmatprep.subr.mxu0 0.0
    %1240 = vmatpush1.msra.mxu0 0.0
    %1241 = vmatprep.subr.mxu0 0.0
    %1242 = vmatpush1.msra.mxu0 0.0
    %1243 = vmatprep.subr.mxu0 0.0
    %1244 = vmatpush1.msra.mxu0 0.0
    %1245 = vmatprep.subr.mxu0 0.0
    %1246 = vmatpush1.msra.mxu0 0.0
    %1247 = vmatprep.subr.mxu0 0.0
    %1248 = vmatpush1.msra.mxu0 0.0
    %1249 = vmatprep.subr.mxu0 0.0
    %1250 = vmatpush1.msra.mxu0 0.0
    %1251 = vmatprep.subr.mxu0 0.0
    %1252 = vmatpush1.msra.mxu0 0.0
    %1253 = vmatprep.subr.mxu0 0.0
    %1254 = vmatpush1.msra.mxu0 0.0
    %1255 = vmatprep.subr.mxu0 0.0
    %1256 = vmatpush1.msra.mxu0 0.0
    %1257 = vmatprep.subr.mxu0 0.0
    %1258 = vmatpush1.msra.mxu0 0.0
    %1259 = vmatprep.subr.mxu0 0.0
    %1260 = vmatpush1.msra.mxu0 0.0
    %1261 = vmatprep.subr.mxu0 0.0
    %1262 = vmatpush1.msra.mxu0 0.0
    %1263 = vmatprep.subr.mxu0 0.0
    %1264 = vmatpush1.msra.mxu0 0.0
    %1265 = vmatprep.subr.mxu0 0.0
    %1266 = vmatpush1.msra.mxu0 0.0
    %1267 = vmatprep.subr.mxu0 0.0
    %1268 = vmatpush1.msra.mxu0 0.0
    %1269 = vmatprep.subr.mxu0 0.0
    %1270 = vmatpush1.msra.mxu0 0.0
    %1271 = vmatprep.subr.mxu0 0.0
    %1272 = vmatpush1.msra.mxu0 0.0
    %1273 = vmatprep.subr.mxu0 0.0
    %1274 = vmatpush1.msra.mxu0 0.0
    %1275 = vmatprep.subr.mxu0 0.0
    %1276 = vmatpush1.msra.mxu0 0.0
    %1277 = vmatprep.subr.mxu0 0.0
    %1278 = vmatpush1.msra.mxu0 0.0
    %1279 = vmatprep.subr.mxu0 0.0
    %1280 = vmatpush1.msra.mxu0 0.0
    %1281 = vmatprep.subr.mxu0 0.0
    %1282 = vmatpush1.msra.mxu0 0.0
    %1283 = vmatprep.subr.mxu0 0.0
    %1284 = vmatpush1.msra.mxu0 0.0
    %1285 = vmatprep.mubr.f32.mxu0 0.0
    %1286 = vmatmul.mubr.f32.gmra.mrb[0].mxu0 %v1219
    %v1287 = vpop.f32.mrb[0].mxu0
    %v1288 = vadd.f32 %v1217, %v1287
    %v1289 = vpop.f32.mrb[0].mxu0
    %1290 = vdwg.mxu0
    %v1291 = vmul.f32 %v1288, 0.01
    %v1292 = vmax.f32 %v1288, %v1291
    %v1293 = vadd.f32 %v1292, %v1208
    %s1294 = scalar_lea.vmem [#allocation5], 160
    %v1295 = vld [vmem:[%s1294] sm:$0xff]
    %v1296 = vld [vmem:[%s1294 + $0x8] sm:$0xff]
    %v1297 = vld [vmem:[%s1294 + $0x10] sm:$0xff]
    %v1298 = vld [vmem:[%s1294 + $0x18] sm:$0xff]
    %v1299 = vlaneseq
    %v1300 = vshrl.u32 %v1299, 7
    %v1301 = vsub.s32 6, %v1300
    %v1302 = vrot.slane %v52, %v1301
    %v1304 = vsel %vm77, %v1293, 0
    %1306 = vmatprep.subr.mxu0 0.0
    %1307 = vmatpush1.msra.mxu0 %v1295
    %1308 = vmatprep.subr.mxu0 0.0
    %1309 = vmatpush1.msra.mxu0 %v1296
    %1310 = vmatprep.subr.mxu0 0.0
    %1311 = vmatpush1.msra.mxu0 %v1297
    %1312 = vmatprep.subr.mxu0 0.0
    %1313 = vmatpush1.msra.mxu0 %v1298
    %1314 = vmatprep.subr.mxu0 0.0
    %1315 = vmatpush1.msra.mxu0 0.0
    %1316 = vmatprep.subr.mxu0 0.0
    %1317 = vmatpush1.msra.mxu0 0.0
    %1318 = vmatprep.subr.mxu0 0.0
    %1319 = vmatpush1.msra.mxu0 0.0
    %1320 = vmatprep.subr.mxu0 0.0
    %1321 = vmatpush1.msra.mxu0 0.0
    %1322 = vmatprep.subr.mxu0 0.0
    %1323 = vmatpush1.msra.mxu0 0.0
    %1324 = vmatprep.subr.mxu0 0.0
    %1325 = vmatpush1.msra.mxu0 0.0
    %1326 = vmatprep.subr.mxu0 0.0
    %1327 = vmatpush1.msra.mxu0 0.0
    %1328 = vmatprep.subr.mxu0 0.0
    %1329 = vmatpush1.msra.mxu0 0.0
    %1330 = vmatprep.subr.mxu0 0.0
    %1331 = vmatpush1.msra.mxu0 0.0
    %1332 = vmatprep.subr.mxu0 0.0
    %1333 = vmatpush1.msra.mxu0 0.0
    %1334 = vmatprep.subr.mxu0 0.0
    %1335 = vmatpush1.msra.mxu0 0.0
    %1336 = vmatprep.subr.mxu0 0.0
    %1337 = vmatpush1.msra.mxu0 0.0
    %1338 = vmatprep.subr.mxu0 0.0
    %1339 = vmatpush1.msra.mxu0 0.0
    %1340 = vmatprep.subr.mxu0 0.0
    %1341 = vmatpush1.msra.mxu0 0.0
    %1342 = vmatprep.subr.mxu0 0.0
    %1343 = vmatpush1.msra.mxu0 0.0
    %1344 = vmatprep.subr.mxu0 0.0
    %1345 = vmatpush1.msra.mxu0 0.0
    %1346 = vmatprep.subr.mxu0 0.0
    %1347 = vmatpush1.msra.mxu0 0.0
    %1348 = vmatprep.subr.mxu0 0.0
    %1349 = vmatpush1.msra.mxu0 0.0
    %1350 = vmatprep.subr.mxu0 0.0
    %1351 = vmatpush1.msra.mxu0 0.0
    %1352 = vmatprep.subr.mxu0 0.0
    %1353 = vmatpush1.msra.mxu0 0.0
    %1354 = vmatprep.subr.mxu0 0.0
    %1355 = vmatpush1.msra.mxu0 0.0
    %1356 = vmatprep.subr.mxu0 0.0
    %1357 = vmatpush1.msra.mxu0 0.0
    %1358 = vmatprep.subr.mxu0 0.0
    %1359 = vmatpush1.msra.mxu0 0.0
    %1360 = vmatprep.subr.mxu0 0.0
    %1361 = vmatpush1.msra.mxu0 0.0
    %1362 = vmatprep.subr.mxu0 0.0
    %1363 = vmatpush1.msra.mxu0 0.0
    %1364 = vmatprep.subr.mxu0 0.0
    %1365 = vmatpush1.msra.mxu0 0.0
    %1366 = vmatprep.subr.mxu0 0.0
    %1367 = vmatpush1.msra.mxu0 0.0
    %1368 = vmatprep.subr.mxu0 0.0
    %1369 = vmatpush1.msra.mxu0 0.0
    %1370 = vmatprep.mubr.f32.mxu0 0.0
    %1371 = vmatmul.mubr.f32.gmra.mrb[0].mxu0 %v1304
    %v1372 = vpop.f32.mrb[0].mxu0
    %v1373 = vadd.f32 %v1302, %v1372
    %v1374 = vpop.f32.mrb[0].mxu0
    %1375 = vdwg.mxu0
    %v1376 = vmul.f32 %v1373, 0.01
    %v1377 = vmax.f32 %v1373, %v1376
    %v1378 = vadd.f32 %v1377, %v1293
    %v1379 = vld [vmem:[%s4] sm:$0xff]
    %v1380 = vld [vmem:[%s4 + $0x8] sm:$0xff]
    %v1381 = vld [vmem:[%s4 + $0x10] sm:$0xff]
    %v1382 = vld [vmem:[%s4 + $0x18] sm:$0xff]
    %v1383 = vlaneseq
    %v1384 = vshrl.u32 %v1383, 7
    %v1385 = vsub.s32 7, %v1384
    %v1386 = vrot.slane %v52, %v1385
    %v1388 = vsel %vm77, %v1378, 0
    %1390 = vmatprep.subr.mxu0 0.0
    %1391 = vmatpush1.msra.mxu0 %v1379
    %1392 = vmatprep.subr.mxu0 0.0
    %1393 = vmatpush1.msra.mxu0 %v1380
    %1394 = vmatprep.subr.mxu0 0.0
    %1395 = vmatpush1.msra.mxu0 %v1381
    %1396 = vmatprep.subr.mxu0 0.0
    %1397 = vmatpush1.msra.mxu0 %v1382
    %1398 = vmatprep.subr.mxu0 0.0
    %1399 = vmatpush1.msra.mxu0 0.0
    %1400 = vmatprep.subr.mxu0 0.0
    %1401 = vmatpush1.msra.mxu0 0.0
    %1402 = vmatprep.subr.mxu0 0.0
    %1403 = vmatpush1.msra.mxu0 0.0
    %1404 = vmatprep.subr.mxu0 0.0
    %1405 = vmatpush1.msra.mxu0 0.0
    %1406 = vmatprep.subr.mxu0 0.0
    %1407 = vmatpush1.msra.mxu0 0.0
    %1408 = vmatprep.subr.mxu0 0.0
    %1409 = vmatpush1.msra.mxu0 0.0
    %1410 = vmatprep.subr.mxu0 0.0
    %1411 = vmatpush1.msra.mxu0 0.0
    %1412 = vmatprep.subr.mxu0 0.0
    %1413 = vmatpush1.msra.mxu0 0.0
    %1414 = vmatprep.subr.mxu0 0.0
    %1415 = vmatpush1.msra.mxu0 0.0
    %1416 = vmatprep.subr.mxu0 0.0
    %1417 = vmatpush1.msra.mxu0 0.0
    %1418 = vmatprep.subr.mxu0 0.0
    %1419 = vmatpush1.msra.mxu0 0.0
    %1420 = vmatprep.subr.mxu0 0.0
    %1421 = vmatpush1.msra.mxu0 0.0
    %1422 = vmatprep.subr.mxu0 0.0
    %1423 = vmatpush1.msra.mxu0 0.0
    %1424 = vmatprep.subr.mxu0 0.0
    %1425 = vmatpush1.msra.mxu0 0.0
    %1426 = vmatprep.subr.mxu0 0.0
    %1427 = vmatpush1.msra.mxu0 0.0
    %1428 = vmatprep.subr.mxu0 0.0
    %1429 = vmatpush1.msra.mxu0 0.0
    %1430 = vmatprep.subr.mxu0 0.0
    %1431 = vmatpush1.msra.mxu0 0.0
    %1432 = vmatprep.subr.mxu0 0.0
    %1433 = vmatpush1.msra.mxu0 0.0
    %1434 = vmatprep.subr.mxu0 0.0
    %1435 = vmatpush1.msra.mxu0 0.0
    %1436 = vmatprep.subr.mxu0 0.0
    %1437 = vmatpush1.msra.mxu0 0.0
    %1438 = vmatprep.subr.mxu0 0.0
    %1439 = vmatpush1.msra.mxu0 0.0
    %1440 = vmatprep.subr.mxu0 0.0
    %1441 = vmatpush1.msra.mxu0 0.0
    %1442 = vmatprep.subr.mxu0 0.0
    %1443 = vmatpush1.msra.mxu0 0.0
    %1444 = vmatprep.subr.mxu0 0.0
    %1445 = vmatpush1.msra.mxu0 0.0
    %1446 = vmatprep.subr.mxu0 0.0
    %1447 = vmatpush1.msra.mxu0 0.0
    %1448 = vmatprep.subr.mxu0 0.0
    %1449 = vmatpush1.msra.mxu0 0.0
    %1450 = vmatprep.subr.mxu0 0.0
    %1451 = vmatpush1.msra.mxu0 0.0
    %1452 = vmatprep.subr.mxu0 0.0
    %1453 = vmatpush1.msra.mxu0 0.0
    %1454 = vmatprep.mubr.f32.mxu0 0.0
    %1455 = vmatmul.mubr.f32.gmra.mrb[0].mxu0 %v1388
    %v1456 = vpop.f32.mrb[0].mxu0
    %v1457 = vadd.f32 %v1386, %v1456
    %v1458 = vpop.f32.mrb[0].mxu0
    %1459 = vdwg.mxu0
    %vm1460 = vcmask 130048
    %1461 = vst.msk [vmem:[#allocation7] sm:$0xff] %vm1460, %v1457
    // Predicated region
    $region34: #{tpu_custom_call.1} parent=1 // pred_check
      _
    $region35: #{tpu_custom_call.1} parent=1 // pred_check_branch
      %1463 = sbr.rel (0) target = $region37
    $region36: #{tpu_custom_call.1} parent=1 // pred_region
      %s1465 = ssub.s32 128, 128
      %1466 = vsyncadd [#allocation4], %s1465
      %s1468 = sshll.u32 [#allocation7], 4
      %s1469 = int_to_ptr.vmem [resolvable:$true] %s1468
      %1471 = dma.vmem_to_hbm [thread:$0]  %s1469, 128, %s6, [#allocation4]
    $region37: #{tpu_custom_call.1} parent=1 // pred_fallthru
      _
    // Predicated region
    $region38: #{tpu_custom_call.1} parent=1 // pred_check
      _
    $region39: #{tpu_custom_call.1} parent=1 // pred_check_branch
      %1473 = sbr.rel (0) target = $region41
    $region40: #{tpu_custom_call.1} parent=1 // pred_region
      %1474 = dma.done [#allocation4], 128
    $region41: #{tpu_custom_call.1} parent=1 // pred_fallthru
      _
    %1475 = vsyncpa [#allocation3], 1
    %1476 = vsyncpa [#allocation6], 1
    %1477 = vsyncpa [#allocation4], 1

</llo_original>
